<compile_context>
chip_gen: v6e
topology: v6e:2x2x1
jax: 0.10.0
libtpu: 0.0.40
codegen_flags: <defaults>
</compile_context>

<pallas_src>
import functools

import jax
import jax.numpy as jnp
from jax import lax
from jax.experimental import pallas as pl
from jax.experimental.pallas import tpu as pltpu

EPS = 1e-5
GROUPS = 32  # nn.GroupNorm(32, C)


# --------------------------------------------------------------------------------------
# In-kernel building block: GroupNorm-affine + SiLU + 3x3 conv over one haloed row panel.
# --------------------------------------------------------------------------------------
def _gn_silu_conv3x3(xh_ref, a_ref, b_ref, w_ref, pbuf_ref, *, R, W, C):
    """xh_ref:  (1, 1, (R+2)*W, C) bf16  haloed input panel (1 halo row above/below).
       a_ref/b_ref: (1, 1, C) f32        per-(image, channel) GN affine: GN(x) = a*x + b.
       w_ref:   (3, 3*C, Cout) bf16      conv weight, ky-major, kx lane-concatenated.
       pbuf_ref: ((R+2)*W, 3*C) bf16     VMEM scratch for the [left|center|right] patch.
       Returns the (R*W, Cout) f32 conv output (bias not added)."""
    L = (R + 2) * W
    RW = R * W

    # GroupNorm (precomputed affine) + SiLU, elementwise in f32 (EUP exp / approx recip).
    y = xh_ref[0, 0].astype(jnp.float32) * a_ref[0] + b_ref[0]            # (L, C)
    y = y * pl.reciprocal(1.0 + jnp.exp(-y), approx=True)                 # SiLU

    # Conv zero padding applies AFTER GN+SiLU: an image-boundary halo row must contribute
    # exactly 0 (not SiLU(GN(0))). Panel-interior halo rows are real neighbor rows.
    q = lax.broadcasted_iota(jnp.int32, (L, 1), 0)                        # flat padded idx
    p_id = pl.program_id(1)
    top_ok = jnp.logical_or(p_id > 0, q >= W)
    bot_ok = jnp.logical_or(p_id < pl.num_programs(1) - 1, q < L - W)
    y = jnp.where(jnp.logical_and(top_ok, bot_ok), y, 0.0)

    # kx-concatenated patch: the +/-1 column shifts are one XLU roll + one select each;
    # left/right image-column wraps land on masked positions.
    col = q % W
    y_l = jnp.where(col > 0, pltpu.roll(y, 1, axis=0), 0.0)               # value at (h, w-1)
    y_r = jnp.where(col < W - 1, pltpu.roll(y, L - 1, axis=0), 0.0)       # value at (h, w+1)
    pbuf_ref[:, 0:C] = y_l.astype(jnp.bfloat16)
    pbuf_ref[:, C:2 * C] = y.astype(jnp.bfloat16)
    pbuf_ref[:, 2 * C:3 * C] = y_r.astype(jnp.bfloat16)

    # 3x3 conv as 3 fat matmuls (K = 3*C); the 3 remaining taps are sublane-aligned row
    # offsets (0, W, 2W). bf16 operands, f32 accumulation on the MXU.
    acc = jnp.dot(pbuf_ref[0:RW, :], w_ref[0], preferred_element_type=jnp.float32)
    acc = acc + jnp.dot(pbuf_ref[W:W + RW, :], w_ref[1], preferred_element_type=jnp.float32)
    acc = acc + jnp.dot(pbuf_ref[2 * W:2 * W + RW, :], w_ref[2],
                        preferred_element_type=jnp.float32)
    return acc


def _stage1_kernel(xh_ref, a1_ref, b1_ref, w1_ref, bc1_ref,
                   h1_ref, psum_ref, psq_ref, pbuf_ref, *, R, W, Cin, Cout):
    """h1 = conv1(SiLU(GN1(x))) for one panel, plus per-panel channel sums for GN2 stats."""
    h = _gn_silu_conv3x3(xh_ref, a1_ref, b1_ref, w1_ref, pbuf_ref,
                         R=R, W=W, C=Cin) + bc1_ref[...]                  # (RW, Cout) f32
    h_bf = h.astype(jnp.bfloat16)
    h1_ref[0] = h_bf
    # GN2 partial stats: keep the HW-axis reduction on the MXU (skinny ones-matmuls) instead
    # of an XLU cross-sublane reduce; the tiny cross-panel reduce happens in the wrapper.
    ones = jnp.ones((1, R * W), jnp.bfloat16)
    psum_ref[0, 0] = jnp.dot(ones, h_bf, preferred_element_type=jnp.float32)
    psq_ref[0, 0] = jnp.dot(ones, (h * h).astype(jnp.bfloat16),
                            preferred_element_type=jnp.float32)


def _stage2_kernel(hh_ref, a2_ref, b2_ref, w2_ref, bc2_ref, x_ref, *rest,
                   R, W, Cin, Cout, has_res_conv):
    """out = conv2(SiLU(GN2(h1))) + residual(x) for one panel."""
    if has_res_conv:
        wr_ref, br_ref, out_ref, pbuf_ref = rest
    else:
        out_ref, pbuf_ref = rest
    h = _gn_silu_conv3x3(hh_ref, a2_ref, b2_ref, w2_ref, pbuf_ref,
                         R=R, W=W, C=Cout) + bc2_ref[...]                 # (RW, Cout) f32
    if has_res_conv:
        res = jnp.dot(x_ref[0], wr_ref[...], preferred_element_type=jnp.float32) + br_ref[...]
    else:
        res = x_ref[0].astype(jnp.float32)                                # nn.Identity
    out_ref[0] = (h + res).astype(out_ref.dtype)


# --------------------------------------------------------------------------------------
# Wrapper-side glue (layouts, GN stats/affine, halo panels, spec construction).
# --------------------------------------------------------------------------------------
def _group_affine(gamma, beta, mean_g, var_g, C):
    """Per-(image, channel) affine (a, b) with GN(x) = a*x + b, from per-group stats."""
    cg = C // GROUPS
    inv = lax.rsqrt(var_g + EPS)                      # (N, G)
    inv_c = jnp.repeat(inv, cg, axis=1)               # (N, C)
    mean_c = jnp.repeat(mean_g, cg, axis=1)
    a = gamma[None, :] * inv_c
    b = beta[None, :] - mean_c * a
    return a[:, None, :], b[:, None, :]               # (N, 1, C) each


def _haloed_panels(img_nhwc, R):
    """(N, H, W, C) -> (N, P, (R+2)*W, C): R-row panels + 1-row halo on each side
    (zero rows at the image top/bottom; the kernel masks those anyway)."""
    N, H, W, C = img_nhwc.shape
    P = H // R
    padded = jnp.pad(img_nhwc, ((0, 0), (1, 1), (0, 0), (0, 0)))
    rows = jnp.arange(P)[:, None] * R + jnp.arange(R + 2)[None, :]        # (P, R+2)
    return padded[:, rows].reshape(N, P, (R + 2) * W, C)


def _cat_weight(w):
    """PyTorch (Cout, Cin, 3, 3) -> (3, 3*Cin, Cout) bf16, ky-major, kx lane-concatenated
    to match the [left | center | right] patch layout."""
    Cout, Cin = w.shape[0], w.shape[1]
    return jnp.transpose(w, (2, 3, 1, 0)).reshape(3, 3 * Cin, Cout).astype(jnp.bfloat16)


def _pick_panel_rows(H, W, max_pixels=1024):
    """Largest divisor R of H with R*W <= max_pixels and (R*W) % 8 == 0 (or R == H)."""
    divs = [r for r in range(1, H + 1) if H % r == 0 and ((r * W) % 8 == 0 or r == H)]
    fitting = [r for r in divs if r * W <= max_pixels]
    return max(fitting) if fitting else min(divs)


def _vmem_limit_bytes(R, W, Cin, Cout):
    """Size the VMEM limit from the actual per-panel buffers (with headroom)."""
    L, RW, C3 = (R + 2) * W, R * W, 3 * max(Cin, Cout)
    est = (2 * L * max(Cin, Cout) * 2     # haloed input panel, double-buffered, bf16
           + 2 * RW * Cin * 2             # residual x panel (stage 2)
           + 2 * RW * Cout * 4            # f32 output panel
           + 2 * RW * Cout * 2            # bf16 h1 output panel (stage 1)
           + 3 * C3 * Cout * 2            # conv weight (single-buffered)
           + Cin * Cout * 2               # 1x1 residual weight
           + L * C3 * 2                   # bf16 patch scratch
           + L * C3 * 4                   # live f32 GN/SiLU/shift temporaries
           + 2 * RW * Cout * 4)           # conv accumulator + epilogue temporaries
    return int(min(max(est * 5 // 4 + (8 << 20), 32 << 20), 100 << 20))


def vae_residual_block(x_nchw, params, *, panel_rows=None):
    """x_nchw: (N, Cin, H, W) float32; params in PyTorch layouts. Returns (N, Cout, H, W) f32."""
    N, Cin, H, W = x_nchw.shape
    Cout = params["w1"].shape[0]
    assert Cin % GROUPS == 0 and Cout % GROUPS == 0
    has_res_conv = "wres" in params
    if not has_res_conv:
        assert Cin == Cout, "identity residual requires Cin == Cout"

    R = panel_rows if panel_rows is not None else _pick_panel_rows(H, W)
    assert H % R == 0, "panel_rows must divide H"
    P = H // R
    RW, L, HW = R * W, (R + 2) * W, H * W
    assert P == 1 or RW % 8 == 0, "panel pixel count must be a multiple of 8"

    # ---- GN1 stats (exact, from f32 x) -> per-channel affine; layouts; weight re-pack ----
    x_nhwc = jnp.transpose(x_nchw, (0, 2, 3, 1)).astype(jnp.float32)      # (N, H, W, Cin)
    xg = x_nhwc.reshape(N, HW, GROUPS, Cin // GROUPS)
    a1, b1 = _group_affine(params["gn1_s"].astype(jnp.float32),
                           params["gn1_b"].astype(jnp.float32),
                           jnp.mean(xg, axis=(1, 3)), jnp.var(xg, axis=(1, 3)), Cin)

    x_bf = x_nhwc.astype(jnp.bfloat16)                # bf16 activation I/O (halves HBM traffic)
    x_hal = _haloed_panels(x_bf, R)                   # (N, P, L, Cin)
    x_flat = x_bf.reshape(N, HW, Cin)                 # residual input (read panel-wise)

    w1cat = _cat_weight(params["w1"])
    b1c = params["b1"].reshape(1, Cout).astype(jnp.float32)
    w2cat = _cat_weight(params["w2"])
    b2c = params["b2"].reshape(1, Cout).astype(jnp.float32)

    cparams = pltpu.CompilerParams(
        dimension_semantics=("parallel", "parallel"),   # batch x panel, both megacore-shardable
        vmem_limit_bytes=_vmem_limit_bytes(R, W, Cin, Cout),
    )

    def _const_spec(shape):
        # Constant-index block: single-buffered to avoid a redundant VMEM copy (perf review).
        return pl.BlockSpec(shape, lambda n, p: tuple(0 for _ in shape),
                            pipeline_mode=pl.Buffered(1))

    # ---- stage 1: h1 = conv1(SiLU(GN1(x))) + per-panel GN2 partial stats ----
    h1, ps1, pq1 = pl.pallas_call(
        functools.partial(_stage1_kernel, R=R, W=W, Cin=Cin, Cout=Cout),
        out_shape=(jax.ShapeDtypeStruct((N, HW, Cout), jnp.bfloat16),
                   jax.ShapeDtypeStruct((N, P, 1, Cout), jnp.float32),
                   jax.ShapeDtypeStruct((N, P, 1, Cout), jnp.float32)),
        grid_spec=pltpu.PrefetchScalarGridSpec(
            num_scalar_prefetch=0,
            grid=(N, P),
            in_specs=[
                pl.BlockSpec((1, 1, L, Cin), lambda n, p: (n, p, 0, 0)),   # haloed x panel
                pl.BlockSpec((1, 1, Cin), lambda n, p: (n, 0, 0)),         # GN1 affine a
                pl.BlockSpec((1, 1, Cin), lambda n, p: (n, 0, 0)),         # GN1 affine b
                _const_spec((3, 3 * Cin, Cout)),                           # conv1 weight
                _const_spec((1, Cout)),                                    # conv1 bias
            ],
            out_specs=(
                pl.BlockSpec((1, RW, Cout), lambda n, p: (n, p, 0)),       # h1 panel (bf16)
                pl.BlockSpec((1, 1, 1, Cout), lambda n, p: (n, p, 0, 0)),  # sum(h1)
                pl.BlockSpec((1, 1, 1, Cout), lambda n, p: (n, p, 0, 0)),  # sum(h1^2)
            ),
            scratch_shapes=[pltpu.VMEM((L, 3 * Cin), jnp.bfloat16)],
        ),
        compiler_params=cparams,
    )(x_hal, a1, b1, w1cat, b1c)

    # ---- GN2 stats from the per-panel partial sums (tiny plain-JAX reduce) ----
    cnt = float(HW * (Cout // GROUPS))
    sum_g = jnp.sum(jnp.sum(ps1[:, :, 0, :], axis=1).reshape(N, GROUPS, Cout // GROUPS), axis=2)
    sq_g = jnp.sum(jnp.sum(pq1[:, :, 0, :], axis=1).reshape(N, GROUPS, Cout // GROUPS), axis=2)
    m2 = sum_g / cnt
    v2 = jnp.maximum(sq_g / cnt - jnp.square(m2), 0.0)
    a2, b2 = _group_affine(params["gn2_s"].astype(jnp.float32),
                           params["gn2_b"].astype(jnp.float32), m2, v2, Cout)

    h1_hal = _haloed_panels(h1.reshape(N, H, W, Cout), R)                  # (N, P, L, Cout)

    # ---- stage 2: out = conv2(SiLU(GN2(h1))) + residual(x) ----
    in_specs2 = [
        pl.BlockSpec((1, 1, L, Cout), lambda n, p: (n, p, 0, 0)),          # haloed h1 panel
        pl.BlockSpec((1, 1, Cout), lambda n, p: (n, 0, 0)),                # GN2 affine a
        pl.BlockSpec((1, 1, Cout), lambda n, p: (n, 0, 0)),                # GN2 affine b
        _const_spec((3, 3 * Cout, Cout)),                                  # conv2 weight
        _const_spec((1, Cout)),                                            # conv2 bias
        pl.BlockSpec((1, RW, Cin), lambda n, p: (n, p, 0)),                # x panel (residual)
    ]
    inputs2 = [h1_hal, a2, b2, w2cat, b2c, x_flat]
    if has_res_conv:
        in_specs2 += [_const_spec((Cin, Cout)), _const_spec((1, Cout))]
        inputs2 += [params["wres"][:, :, 0, 0].T.astype(jnp.bfloat16),
                    params["bres"].reshape(1, Cout).astype(jnp.float32)]

    out_flat = pl.pallas_call(
        functools.partial(_stage2_kernel, R=R, W=W, Cin=Cin, Cout=Cout,
                          has_res_conv=has_res_conv),
        out_shape=jax.ShapeDtypeStruct((N, HW, Cout), jnp.float32),
        grid_spec=pltpu.PrefetchScalarGridSpec(
            num_scalar_prefetch=0,
            grid=(N, P),
            in_specs=in_specs2,
            out_specs=pl.BlockSpec((1, RW, Cout), lambda n, p: (n, p, 0)),
            scratch_shapes=[pltpu.VMEM((L, 3 * Cout), jnp.bfloat16)],
        ),
        compiler_params=cparams,
    )(*inputs2)

    return jnp.transpose(out_flat.reshape(N, H, W, Cout), (0, 3, 1, 2))


# ---------------- pure-JAX reference (ground truth, f32 / HIGHEST) ----------------
def _reference(x, p):
    def gn(v, scale, bias):
        N, C, H, W = v.shape
        vg = v.reshape(N, GROUPS, (C // GROUPS) * H * W)
        mean = vg.mean(axis=2, keepdims=True)
        var = vg.var(axis=2, keepdims=True)
        vn = ((vg - mean) / jnp.sqrt(var + EPS)).reshape(N, C, H, W)
        return vn * scale[None, :, None, None] + bias[None, :, None, None]

    def silu(v):
        return v * jax.nn.sigmoid(v)

    def conv(v, w, b, pad):
        y = lax.conv_general_dilated(v, w, (1, 1), [(pad, pad), (pad, pad)],
                                     dimension_numbers=("NCHW", "OIHW", "NCHW"),
                                     precision=lax.Precision.HIGHEST)
        return y + b[None, :, None, None]

    h = conv(silu(gn(x, p["gn1_s"], p["gn1_b"])), p["w1"], p["b1"], 1)
    h = conv(silu(gn(h, p["gn2_s"], p["gn2_b"])), p["w2"], p["b2"], 1)
    res = conv(x, p["wres"], p["bres"], 0) if "wres" in p else x
    return h + res


if __name__ == "__main__":
    def make_params(key, Cin, Cout, identity):
        ks = jax.random.split(key, 10)
        p = {
            "gn1_s": 1.0 + 0.1 * jax.random.normal(ks[0], (Cin,), jnp.float32),
            "gn1_b": 0.1 * jax.random.normal(ks[1], (Cin,), jnp.float32),
            "w1": 0.1 * jax.random.normal(ks[2], (Cout, Cin, 3, 3), jnp.float32),
            "b1": 0.05 * jax.random.normal(ks[3], (Cout,), jnp.float32),
            "gn2_s": 1.0 + 0.1 * jax.random.normal(ks[4], (Cout,), jnp.float32),
            "gn2_b": 0.1 * jax.random.normal(ks[5], (Cout,), jnp.float32),
            "w2": 0.1 * jax.random.normal(ks[6], (Cout, Cout, 3, 3), jnp.float32),
            "b2": 0.05 * jax.random.normal(ks[7], (Cout,), jnp.float32),
        }
        if not identity:
            p["wres"] = 0.1 * jax.random.normal(ks[8], (Cout, Cin, 1, 1), jnp.float32)
            p["bres"] = 0.05 * jax.random.normal(ks[9], (Cout,), jnp.float32)
        return p

    # Tolerance: bf16 MXU operands, bf16 activation I/O through HBM and the approximate EUP
    # reciprocal in SiLU give a few e-2 max-abs drift vs the fp32/HIGHEST reference.
    TOL = 6e-2
    key = jax.random.PRNGKey(0)
    k1, k2, k3, k4 = jax.random.split(key, 4)

    # Case 1: Cin != Cout -> 1x1-conv residual; 2 row-panels per image (halo path exercised).
    N, Cin, Cout, H, W = 2, 32, 64, 8, 8
    params = make_params(k1, Cin, Cout, identity=False)
    x = jax.random.normal(k2, (N, Cin, H, W), jnp.float32)
    ref = _reference(x, params)
    out = jax.block_until_ready(vae_residual_block(x, params, panel_rows=4))
    assert out.shape == (N, Cout, H, W)
    err = float(jnp.max(jnp.abs(out - ref)))
    assert err < TOL, f"conv-residual / 2-panel case: max abs err {err}"

    # Same inputs, auto-picked panel size (single panel per image) -> monolithic path.
    out_1p = jax.block_until_ready(vae_residual_block(x, params))
    err_1p = float(jnp.max(jnp.abs(out_1p - ref)))
    assert err_1p < TOL, f"conv-residual / 1-panel case: max abs err {err_1p}"

    # Case 2: Cin == Cout -> nn.Identity residual (no 1x1 matmul); 4 row-panels per image.
    Cio = 32
    params_id = make_params(k3, Cio, Cio, identity=True)
    x_id = jax.random.normal(k4, (N, Cio, H, W), jnp.float32)
    out_id = jax.block_until_ready(vae_residual_block(x_id, params_id, panel_rows=2))
    assert out_id.shape == (N, Cio, H, W)
    err_id = float(jnp.max(jnp.abs(out_id - _reference(x_id, params_id))))
    assert err_id < TOL, f"identity-residual / 4-panel case: max abs err {err_id}"

    print("KERNEL_OK")
</pallas_src>

<mosaic_0001>
module attributes {stable_mosaic.version = 11 : i64} {
  func.func @_stage1_kernel(%arg0: i32, %arg1: i32, %arg2: memref<1x1x48x32xbf16, #tpu.memory_space<vmem>>, %arg3: memref<1x1x32xf32, #tpu.memory_space<vmem>>, %arg4: memref<1x1x32xf32, #tpu.memory_space<vmem>>, %arg5: memref<3x96x64xbf16, #tpu.memory_space<vmem>>, %arg6: memref<1x64xf32, #tpu.memory_space<vmem>>, %arg7: memref<1x32x64xbf16, #tpu.memory_space<vmem>>, %arg8: memref<1x1x1x64xf32, #tpu.memory_space<vmem>>, %arg9: memref<1x1x1x64xf32, #tpu.memory_space<vmem>>, %arg10: memref<48x96xbf16, #tpu.memory_space<vmem>>) attributes {dimension_semantics = [#tpu.dimension_semantics<parallel>, #tpu.dimension_semantics<parallel>], iteration_bounds = array<i64: 2, 2>, scalar_prefetch = 0 : i64, scratch_operands = 1 : i64, tpu.core_type = #tpu.core_type<tc>, window_params = [{transform_indices = @transform_0, window_bounds = array<i64: 1, 1, 48, 32>}, {transform_indices = @transform_1, window_bounds = array<i64: 1, 1, 32>}, {transform_indices = @transform_2, window_bounds = array<i64: 1, 1, 32>}, {pipeline_mode = #tpu.pipeline_mode<synchronous>, transform_indices = @transform_3, window_bounds = array<i64: 3, 96, 64>}, {pipeline_mode = #tpu.pipeline_mode<synchronous>, transform_indices = @transform_4, window_bounds = array<i64: 1, 64>}, {transform_indices = @transform_5, window_bounds = array<i64: 1, 32, 64>}, {transform_indices = @transform_6, window_bounds = array<i64: 1, 1, 1, 64>}, {transform_indices = @transform_7, window_bounds = array<i64: 1, 1, 1, 64>}]} {
    %c0 = arith.constant 0 : index
    %c0_0 = arith.constant 0 : index
    %c0_1 = arith.constant 0 : index
    %c0_2 = arith.constant 0 : index
    %0 = vector.load %arg2[%c0, %c0_0, %c0_1, %c0_2] : memref<1x1x48x32xbf16, #tpu.memory_space<vmem>>, vector<1x1x48x32xbf16>
    %1 = vector.shape_cast %0 : vector<1x1x48x32xbf16> to vector<48x32xbf16>
    %2 = arith.extf %1 : vector<48x32xbf16> to vector<48x32xf32>
    %c0_3 = arith.constant 0 : index
    %c0_4 = arith.constant 0 : index
    %c0_5 = arith.constant 0 : index
    %3 = vector.load %arg3[%c0_3, %c0_4, %c0_5] : memref<1x1x32xf32, #tpu.memory_space<vmem>>, vector<1x1x32xf32>
    %4 = vector.shape_cast %3 : vector<1x1x32xf32> to vector<1x32xf32>
    %5 = vector.broadcast %4 : vector<1x32xf32> to vector<48x32xf32>
    %6 = arith.mulf %2, %5 : vector<48x32xf32>
    %c0_6 = arith.constant 0 : index
    %c0_7 = arith.constant 0 : index
    %c0_8 = arith.constant 0 : index
    %7 = vector.load %arg4[%c0_6, %c0_7, %c0_8] : memref<1x1x32xf32, #tpu.memory_space<vmem>>, vector<1x1x32xf32>
    %8 = vector.shape_cast %7 : vector<1x1x32xf32> to vector<1x32xf32>
    %9 = vector.broadcast %8 : vector<1x32xf32> to vector<48x32xf32>
    %10 = arith.addf %6, %9 : vector<48x32xf32>
    %cst = arith.constant 0.000000e+00 : f32
    %11 = vector.broadcast %cst : f32 to vector<48x32xf32>
    %12 = arith.subf %11, %10 : vector<48x32xf32>
    %13 = math.exp %12 : vector<48x32xf32>
    %cst_9 = arith.constant 1.000000e+00 : f32
    %14 = vector.broadcast %cst_9 : f32 to vector<48x32xf32>
    %15 = arith.addf %14, %13 : vector<48x32xf32>
    %16 = tpu.reciprocal %15 {approx = true} : vector<48x32xf32> -> vector<48x32xf32>
    %17 = arith.mulf %10, %16 : vector<48x32xf32>
    %18 = tpu.iota {dimensions = array<i32: 0>} : vector<48x1xi32>
    %c0_i32 = arith.constant 0 : i32
    %19 = arith.cmpi sgt, %arg1, %c0_i32 : i32
    %c8_i32 = arith.constant 8 : i32
    %20 = vector.broadcast %c8_i32 : i32 to vector<48x1xi32>
    %21 = arith.cmpi sge, %18, %20 : vector<48x1xi32>
    %22 = vector.broadcast %19 : i1 to vector<48x1xi1>
    %23 = arith.ori %22, %21 : vector<48x1xi1>
    %c1_i32 = arith.constant 1 : i32
    %24 = arith.cmpi slt, %arg1, %c1_i32 : i32
    %c40_i32 = arith.constant 40 : i32
    %25 = vector.broadcast %c40_i32 : i32 to vector<48x1xi32>
    %26 = arith.cmpi slt, %18, %25 : vector<48x1xi32>
    %27 = vector.broadcast %24 : i1 to vector<48x1xi1>
    %28 = arith.ori %27, %26 : vector<48x1xi1>
    %29 = arith.andi %23, %28 : vector<48x1xi1>
    %cst_10 = arith.constant 0.000000e+00 : f32
    %30 = vector.shape_cast %29 : vector<48x1xi1> to vector<48x1xi1>
    %31 = vector.broadcast %30 : vector<48x1xi1> to vector<48x32xi1>
    %32 = vector.broadcast %cst_10 : f32 to vector<48x32xf32>
    %33 = arith.select %31, %17, %32 : vector<48x32xi1>, vector<48x32xf32>
    %c8_i32_11 = arith.constant 8 : i32
    %c0_i32_12 = arith.constant 0 : i32
    %34 = arith.cmpi eq, %c8_i32_11, %c0_i32_12 : i32
    %c1_i32_13 = arith.constant 1 : i32
    %35 = arith.select %34, %c1_i32_13, %c8_i32_11 : i32
    %36 = vector.broadcast %35 : i32 to vector<48x1xi32>
    %37 = arith.remsi %18, %36 : vector<48x1xi32>
    %c0_i32_14 = arith.constant 0 : i32
    %38 = vector.broadcast %c0_i32_14 : i32 to vector<48x1xi32>
    %39 = arith.cmpi ne, %37, %38 : vector<48x1xi32>
    %c0_i32_15 = arith.constant 0 : i32
    %40 = vector.broadcast %c0_i32_15 : i32 to vector<48x1xi32>
    %41 = arith.cmpi slt, %37, %40 : vector<48x1xi32>
    %c0_i32_16 = arith.constant 0 : i32
    %42 = arith.cmpi slt, %35, %c0_i32_16 : i32
    %43 = vector.broadcast %42 : i1 to vector<48x1xi1>
    %44 = vector.broadcast %43 : vector<48x1xi1> to vector<48x1xi1>
    %45 = arith.xori %41, %44 : vector<48x1xi1>
    %46 = arith.andi %45, %39 : vector<48x1xi1>
    %47 = vector.broadcast %35 : i32 to vector<48x1xi32>
    %48 = arith.addi %37, %47 : vector<48x1xi32>
    %49 = arith.select %46, %48, %37 : vector<48x1xi1>, vector<48x1xi32>
    %c0_i32_17 = arith.constant 0 : i32
    %50 = vector.broadcast %c0_i32_17 : i32 to vector<48x1xi32>
    %51 = arith.cmpi sgt, %49, %50 : vector<48x1xi32>
    %c1_i32_18 = arith.constant 1 : i32
    %52 = tpu.dynamic_rotate %33 by %c1_i32_18 dim 0 : vector<48x32xf32>, i32 -> vector<48x32xf32>
    %cst_19 = arith.constant 0.000000e+00 : f32
    %53 = vector.shape_cast %51 : vector<48x1xi1> to vector<48x1xi1>
    %54 = vector.broadcast %53 : vector<48x1xi1> to vector<48x32xi1>
    %55 = vector.broadcast %cst_19 : f32 to vector<48x32xf32>
    %56 = arith.select %54, %52, %55 : vector<48x32xi1>, vector<48x32xf32>
    %c7_i32 = arith.constant 7 : i32
    %57 = vector.broadcast %c7_i32 : i32 to vector<48x1xi32>
    %58 = arith.cmpi slt, %49, %57 : vector<48x1xi32>
    %c47_i32 = arith.constant 47 : i32
    %59 = tpu.dynamic_rotate %33 by %c47_i32 dim 0 : vector<48x32xf32>, i32 -> vector<48x32xf32>
    %cst_20 = arith.constant 0.000000e+00 : f32
    %60 = vector.shape_cast %58 : vector<48x1xi1> to vector<48x1xi1>
    %61 = vector.broadcast %60 : vector<48x1xi1> to vector<48x32xi1>
    %62 = vector.broadcast %cst_20 : f32 to vector<48x32xf32>
    %63 = arith.select %61, %59, %62 : vector<48x32xi1>, vector<48x32xf32>
    %64 = arith.truncf %56 : vector<48x32xf32> to vector<48x32xbf16>
    %c0_21 = arith.constant 0 : index
    %c0_22 = arith.constant 0 : index
    %65 = vector.load %arg10[%c0_21, %c0_22] : memref<48x96xbf16, #tpu.memory_space<vmem>>, vector<48x32xbf16>
    tpu.vector_store %arg10[%c0_21, %c0_22], %64 {strides = array<i32>} : memref<48x96xbf16, #tpu.memory_space<vmem>>, vector<48x32xbf16>,
    %66 = arith.truncf %33 : vector<48x32xf32> to vector<48x32xbf16>
    %c0_23 = arith.constant 0 : index
    %c32 = arith.constant 32 : index
    %67 = vector.load %arg10[%c0_23, %c32] : memref<48x96xbf16, #tpu.memory_space<vmem>>, vector<48x32xbf16>
    tpu.vector_store %arg10[%c0_23, %c32], %66 {strides = array<i32>} : memref<48x96xbf16, #tpu.memory_space<vmem>>, vector<48x32xbf16>,
    %68 = arith.truncf %63 : vector<48x32xf32> to vector<48x32xbf16>
    %c0_24 = arith.constant 0 : index
    %c64 = arith.constant 64 : index
    %69 = vector.load %arg10[%c0_24, %c64] : memref<48x96xbf16, #tpu.memory_space<vmem>>, vector<48x32xbf16>
    tpu.vector_store %arg10[%c0_24, %c64], %68 {strides = array<i32>} : memref<48x96xbf16, #tpu.memory_space<vmem>>, vector<48x32xbf16>,
    %c0_25 = arith.constant 0 : index
    %c0_26 = arith.constant 0 : index
    %70 = vector.load %arg10[%c0_25, %c0_26] : memref<48x96xbf16, #tpu.memory_space<vmem>>, vector<32x96xbf16>
    %c0_27 = arith.constant 0 : index
    %c0_28 = arith.constant 0 : index
    %c0_29 = arith.constant 0 : index
    %71 = vector.load %arg5[%c0_27, %c0_28, %c0_29] : memref<3x96x64xbf16, #tpu.memory_space<vmem>>, vector<1x96x64xbf16>
    %72 = vector.shape_cast %71 : vector<1x96x64xbf16> to vector<96x64xbf16>
    %cst_30 = arith.constant dense<0.000000e+00> : vector<32x64xf32>
    %73 = tpu.matmul %70, %72, %cst_30 {dimension_numbers = #tpu.dot_dimension_numbers<[1], [0], [0], [1], [0, 0, 1, 1], [], []>} : vector<32x96xbf16>, vector<96x64xbf16>, vector<32x64xf32> -> vector<32x64xf32>
    %c8 = arith.constant 8 : index
    %c0_31 = arith.constant 0 : index
    %74 = vector.load %arg10[%c8, %c0_31] : memref<48x96xbf16, #tpu.memory_space<vmem>>, vector<32x96xbf16>
    %c1 = arith.constant 1 : index
    %c0_32 = arith.constant 0 : index
    %c0_33 = arith.constant 0 : index
    %75 = vector.load %arg5[%c1, %c0_32, %c0_33] : memref<3x96x64xbf16, #tpu.memory_space<vmem>>, vector<1x96x64xbf16>
    %76 = vector.shape_cast %75 : vector<1x96x64xbf16> to vector<96x64xbf16>
    %cst_34 = arith.constant dense<0.000000e+00> : vector<32x64xf32>
    %77 = tpu.matmul %74, %76, %cst_34 {dimension_numbers = #tpu.dot_dimension_numbers<[1], [0], [0], [1], [0, 0, 1, 1], [], []>} : vector<32x96xbf16>, vector<96x64xbf16>, vector<32x64xf32> -> vector<32x64xf32>
    %78 = arith.addf %73, %77 : vector<32x64xf32>
    %c16 = arith.constant 16 : index
    %c0_35 = arith.constant 0 : index
    %79 = vector.load %arg10[%c16, %c0_35] : memref<48x96xbf16, #tpu.memory_space<vmem>>, vector<32x96xbf16>
    %c2 = arith.constant 2 : index
    %c0_36 = arith.constant 0 : index
    %c0_37 = arith.constant 0 : index
    %80 = vector.load %arg5[%c2, %c0_36, %c0_37] : memref<3x96x64xbf16, #tpu.memory_space<vmem>>, vector<1x96x64xbf16>
    %81 = vector.shape_cast %80 : vector<1x96x64xbf16> to vector<96x64xbf16>
    %cst_38 = arith.constant dense<0.000000e+00> : vector<32x64xf32>
    %82 = tpu.matmul %79, %81, %cst_38 {dimension_numbers = #tpu.dot_dimension_numbers<[1], [0], [0], [1], [0, 0, 1, 1], [], []>} : vector<32x96xbf16>, vector<96x64xbf16>, vector<32x64xf32> -> vector<32x64xf32>
    %83 = arith.addf %78, %82 : vector<32x64xf32>
    %c0_39 = arith.constant 0 : index
    %c0_40 = arith.constant 0 : index
    %84 = vector.load %arg6[%c0_39, %c0_40] : memref<1x64xf32, #tpu.memory_space<vmem>>, vector<1x64xf32>
    %85 = vector.broadcast %84 : vector<1x64xf32> to vector<32x64xf32>
    %86 = arith.addf %83, %85 : vector<32x64xf32>
    %87 = arith.truncf %86 : vector<32x64xf32> to vector<32x64xbf16>
    %c0_41 = arith.constant 0 : index
    %c0_42 = arith.constant 0 : index
    %c0_43 = arith.constant 0 : index
    %88 = vector.load %arg7[%c0_41, %c0_42, %c0_43] : memref<1x32x64xbf16, #tpu.memory_space<vmem>>, vector<1x32x64xbf16>
    %89 = vector.shape_cast %88 : vector<1x32x64xbf16> to vector<32x64xbf16>
    %90 = vector.shape_cast %87 : vector<32x64xbf16> to vector<1x32x64xbf16>
    tpu.vector_store %arg7[%c0_41, %c0_42, %c0_43], %90 {strides = array<i32>} : memref<1x32x64xbf16, #tpu.memory_space<vmem>>, vector<1x32x64xbf16>,
    %cst_44 = arith.constant 1.000000e+00 : bf16
    %91 = vector.broadcast %cst_44 : bf16 to vector<1x32xbf16>
    %cst_45 = arith.constant dense<0.000000e+00> : vector<1x64xf32>
    %92 = tpu.matmul %91, %87, %cst_45 {dimension_numbers = #tpu.dot_dimension_numbers<[1], [0], [0], [1], [0, 0, 1, 1], [], []>} : vector<1x32xbf16>, vector<32x64xbf16>, vector<1x64xf32> -> vector<1x64xf32>
    %c0_46 = arith.constant 0 : index
    %c0_47 = arith.constant 0 : index
    %c0_48 = arith.constant 0 : index
    %c0_49 = arith.constant 0 : index
    %93 = vector.load %arg8[%c0_46, %c0_47, %c0_48, %c0_49] : memref<1x1x1x64xf32, #tpu.memory_space<vmem>>, vector<1x1x1x64xf32>
    %94 = vector.shape_cast %93 : vector<1x1x1x64xf32> to vector<1x64xf32>
    %95 = vector.shape_cast %92 : vector<1x64xf32> to vector<1x1x1x64xf32>
    tpu.vector_store %arg8[%c0_46, %c0_47, %c0_48, %c0_49], %95 {strides = array<i32>} : memref<1x1x1x64xf32, #tpu.memory_space<vmem>>, vector<1x1x1x64xf32>,
    %96 = arith.mulf %86, %86 : vector<32x64xf32>
    %97 = arith.truncf %96 : vector<32x64xf32> to vector<32x64xbf16>
    %cst_50 = arith.constant dense<0.000000e+00> : vector<1x64xf32>
    %98 = tpu.matmul %91, %97, %cst_50 {dimension_numbers = #tpu.dot_dimension_numbers<[1], [0], [0], [1], [0, 0, 1, 1], [], []>} : vector<1x32xbf16>, vector<32x64xbf16>, vector<1x64xf32> -> vector<1x64xf32>
    %c0_51 = arith.constant 0 : index
    %c0_52 = arith.constant 0 : index
    %c0_53 = arith.constant 0 : index
    %c0_54 = arith.constant 0 : index
    %99 = vector.load %arg9[%c0_51, %c0_52, %c0_53, %c0_54] : memref<1x1x1x64xf32, #tpu.memory_space<vmem>>, vector<1x1x1x64xf32>
    %100 = vector.shape_cast %99 : vector<1x1x1x64xf32> to vector<1x64xf32>
    %101 = vector.shape_cast %98 : vector<1x64xf32> to vector<1x1x1x64xf32>
    tpu.vector_store %arg9[%c0_51, %c0_52, %c0_53, %c0_54], %101 {strides = array<i32>} : memref<1x1x1x64xf32, #tpu.memory_space<vmem>>, vector<1x1x1x64xf32>,
    return
  }
  func.func @transform_0(%arg0: i32, %arg1: i32) -> (i32, i32, i32, i32) {
    %c0_i32 = arith.constant 0 : i32
    %c0_i32_0 = arith.constant 0 : i32
    %c0_i32_1 = arith.constant 0 : i32
    return %arg0, %arg1, %c0_i32, %c0_i32_0 : i32, i32, i32, i32
  }
  func.func @transform_1(%arg0: i32, %arg1: i32) -> (i32, i32, i32) {
    %c0_i32 = arith.constant 0 : i32
    %c0_i32_0 = arith.constant 0 : i32
    %c0_i32_1 = arith.constant 0 : i32
    return %arg0, %c0_i32, %c0_i32_0 : i32, i32, i32
  }
  func.func @transform_2(%arg0: i32, %arg1: i32) -> (i32, i32, i32) {
    %c0_i32 = arith.constant 0 : i32
    %c0_i32_0 = arith.constant 0 : i32
    %c0_i32_1 = arith.constant 0 : i32
    return %arg0, %c0_i32, %c0_i32_0 : i32, i32, i32
  }
  func.func @transform_3(%arg0: i32, %arg1: i32) -> (i32, i32, i32) {
    %c0_i32 = arith.constant 0 : i32
    %c0_i32_0 = arith.constant 0 : i32
    %c0_i32_1 = arith.constant 0 : i32
    %c0_i32_2 = arith.constant 0 : i32
    return %c0_i32, %c0_i32_0, %c0_i32_1 : i32, i32, i32
  }
  func.func @transform_4(%arg0: i32, %arg1: i32) -> (i32, i32) {
    %c0_i32 = arith.constant 0 : i32
    %c0_i32_0 = arith.constant 0 : i32
    %c0_i32_1 = arith.constant 0 : i32
    return %c0_i32, %c0_i32_0 : i32, i32
  }
  func.func @transform_5(%arg0: i32, %arg1: i32) -> (i32, i32, i32) {
    %c0_i32 = arith.constant 0 : i32
    %c0_i32_0 = arith.constant 0 : i32
    return %arg0, %arg1, %c0_i32 : i32, i32, i32
  }
  func.func @transform_6(%arg0: i32, %arg1: i32) -> (i32, i32, i32, i32) {
    %c0_i32 = arith.constant 0 : i32
    %c0_i32_0 = arith.constant 0 : i32
    %c0_i32_1 = arith.constant 0 : i32
    return %arg0, %arg1, %c0_i32, %c0_i32_0 : i32, i32, i32, i32
  }
  func.func @transform_7(%arg0: i32, %arg1: i32) -> (i32, i32, i32, i32) {
    %c0_i32 = arith.constant 0 : i32
    %c0_i32_0 = arith.constant 0 : i32
    %c0_i32_1 = arith.constant 0 : i32
    return %arg0, %arg1, %c0_i32, %c0_i32_0 : i32, i32, i32, i32
  }
}

</mosaic_0001>

<llo_original>
// kernel: tpu_custom_call.1
$region0: #{tpu_custom_call.1}
  #allocation0 [shape = 'u32[]', space=smem, size = 0x4, offset = 0x4, fixed_abs, tag = 'smem constant byte address 0x4 - core index']
  #allocation1 [shape = 'u32[144,128]{1,0:T(1,128)}', space=vmem, size = 0x12000, scoped, tag = 'internal scratch']
  #allocation2 [shape = 'bf16[48,96]{1,0:T(8,128)(2,1)}', space=vmem, size = 0x3000, scoped, tag = 'scratch operand']
  %s0 = inlined_call_operand.vmem [shape: bf16[2,2,48,32], index: 0, kind: input, shape index: {}]
  %s1 = inlined_call_operand.vmem [shape: f32[2,1,32], index: 1, kind: input, shape index: {}]
  %s2 = inlined_call_operand.vmem [shape: f32[2,1,32], index: 2, kind: input, shape index: {}]
  %s3 = inlined_call_operand.vmem [shape: bf16[3,96,64], index: 3, kind: input, shape index: {}]
  %s4 = inlined_call_operand.vmem [shape: f32[1,64], index: 4, kind: input, shape index: {}]
  %s5 = inlined_call_operand.hbm [shape: bf16[2,64,64], index: 5, kind: output, shape index: {0}]
  %s6 = inlined_call_operand.hbm [shape: f32[2,2,1,64], index: 6, kind: output, shape index: {1}]
  %s7 = inlined_call_operand.hbm [shape: f32[2,2,1,64], index: 7, kind: output, shape index: {2}]
  %8 = xla_tuple %s5, %s6, %s7
  %s9 = sld [smem:[#allocation0]]
  $region69: #{tpu_custom_call.1} parent=0
    _
  %s11 = ssub.s32 1, %s9
  %s12 = scalar_select 0, %s11, %s9
  $region1: #{tpu_custom_call.1} parent=0
    #allocation3 [shape = 'u8[16384]{0}', space=vmem, size = 0x4000, scoped, tag = 'output window, operand 0']
    #allocation4 [shape = 's32[2]{0}', space=sflag, size = 0x8, scoped, tag = 'scoped memory for tpu_custom_call.1']
    #allocation5 [shape = 'u8[1024]{0}', space=vmem, size = 0x400, scoped, tag = 'output window, operand 1']
    #allocation6 [shape = 's32[2]{0}', space=sflag, size = 0x8, scoped, tag = 'scoped memory for tpu_custom_call.1']
    #allocation7 [shape = 'u8[1024]{0}', space=vmem, size = 0x400, scoped, tag = 'output window, operand 2']
    %13 = vsyncpa [#allocation4], 0
    %s14 = scalar_lea.sflag [#allocation4], 1
    %15 = vsyncpa %s14, 0
    %16 = vsyncpa [#allocation6], 0
    %s17 = scalar_lea.sflag [#allocation6], 1
    %18 = vsyncpa %s17, 0
    loop: start=0, step=1, limit=6
    $region2: #{tpu_custom_call.1} parent=1 // loop_pre_header
      _
    $region3: #{tpu_custom_call.1} parent=1 // loop_header
      %s20 = sphi 0, %s24
      %p21 = scmp.ge.s32.totalorder %s20, 6
      %s27 = sphi 0, %s39
      %s28 = sphi 0, %s35
      %s29 = sphi 0, %s27
      %s30 = sphi 0, %s28
      %s31 = sphi 0, %s29
      %s32 = sphi 0, %s30
      %s44 = sphi 0, %s46
      %s47 = sphi 0, %s44
      %s48 = sphi 0, %s47
      %s64 = sphi 0, %s48
      %s70 = sphi 0, %s72
      %s73 = sphi 0, %s70
      %s74 = sphi 0, %s73
      %s90 = sphi 0, %s74
      %s96 = sphi 0, %s98
      %s99 = sphi 0, %s96
      %s100 = sphi 0, %s99
      %s116 = sphi 0, %s100
      %s120 = sphi 0, %s120
      %s122 = sphi 0, %s120
      %s123 = sphi 0, %s122
      %s137 = sphi 0, %s123
      %s141 = sphi 0, %s141
      %s143 = sphi 0, %s141
      %s144 = sphi 0, %s143
      %s158 = sphi 0, %s144
      %s166 = sphi 0, %s168
      %s169 = sphi 0, %s166
      %s170 = sphi 0, %s169
      %s186 = sphi 0, %s170
      %s194 = sphi 0, %s196
      %s197 = sphi 0, %s194
      %s198 = sphi 0, %s197
      %s214 = sphi 0, %s198
      %s222 = sphi 0, %s224
      %s225 = sphi 0, %s222
      %s226 = sphi 0, %s225
      %s242 = sphi 0, %s226
    $region4: #{tpu_custom_call.1} parent=1 // loop_header_branch
      %23 = sbr.rel (%p21) target = $region8
    $region5: #{tpu_custom_call.1} parent=1 // loop_body
      %s25 = ssub.s32 %s20, 1
      %s26 = ssub.s32 %s20, 2
      %s33 = sadd.s32 1, %s28
      %p34 = scmp.ge.s32.totalorder %s33, 2
      %s35 = scalar_select %p34, 0, %s33
      %s36 = sadd.s32 1, %s27
      %s37 = scalar_select %p34, %s36, %s27
      %p38 = scmp.ge.s32.totalorder %s37, 2
      %s39 = scalar_select %p38, 0, %s37
      %s40 = ssub.s32 %s27, %s39
      %s41 = ssub.s32 %s28, %s35
      %s42 = sor.u32 %s40, %s41
      %p43 = scmp.eq.s32.totalorder %s42, 0
      %s45 = sadd.s32 %s44, 1
      %s46 = scalar_select %p43, %s44, %s45
      %p49 = pneg %p43
      %p50 = scmp.eq.s32.totalorder %s20, 3
      %p51 = por %p49, %p50
      %p52 = scmp.ne.s32.totalorder %s44, %s47
      %p53 = scmp.eq.s32.totalorder %s20, 0
      %p54 = por %p52, %p53
      %p55 = scmp.ne.s32.totalorder %s44, %s47
      %p56 = scmp.eq.s32.totalorder %s25, 3
      %p57 = por %p55, %p56
      %p58 = scmp.ne.s32.totalorder %s47, %s48
      %p59 = scmp.eq.s32.totalorder %s25, 0
      %p60 = por %p58, %p59
      %p61 = scmp.ne.s32.totalorder %s47, %s48
      %p62 = scmp.eq.s32.totalorder %s26, 3
      %p63 = por %p61, %p62
      %p65 = scmp.ne.s32.totalorder %s48, %s64
      %p66 = scmp.eq.s32.totalorder %s26, 0
      %p67 = por %p65, %p66
      %s68 = ssub.s32 %s27, %s39
      %p69 = scmp.eq.s32.totalorder %s68, 0
      %s71 = sadd.s32 %s70, 1
      %s72 = scalar_select %p69, %s70, %s71
      %p75 = pneg %p69
      %p76 = scmp.eq.s32.totalorder %s20, 3
      %p77 = por %p75, %p76
      %p78 = scmp.ne.s32.totalorder %s70, %s73
      %p79 = scmp.eq.s32.totalorder %s20, 0
      %p80 = por %p78, %p79
      %p81 = scmp.ne.s32.totalorder %s70, %s73
      %p82 = scmp.eq.s32.totalorder %s25, 3
      %p83 = por %p81, %p82
      %p84 = scmp.ne.s32.totalorder %s73, %s74
      %p85 = scmp.eq.s32.totalorder %s25, 0
      %p86 = por %p84, %p85
      %p87 = scmp.ne.s32.totalorder %s73, %s74
      %p88 = scmp.eq.s32.totalorder %s26, 3
      %p89 = por %p87, %p88
      %p91 = scmp.ne.s32.totalorder %s74, %s90
      %p92 = scmp.eq.s32.totalorder %s26, 0
      %p93 = por %p91, %p92
      %s94 = ssub.s32 %s27, %s39
      %p95 = scmp.eq.s32.totalorder %s94, 0
      %s97 = sadd.s32 %s96, 1
      %s98 = scalar_select %p95, %s96, %s97
      %p101 = pneg %p95
      %p102 = scmp.eq.s32.totalorder %s20, 3
      %p103 = por %p101, %p102
      %p104 = scmp.ne.s32.totalorder %s96, %s99
      %p105 = scmp.eq.s32.totalorder %s20, 0
      %p106 = por %p104, %p105
      %p107 = scmp.ne.s32.totalorder %s96, %s99
      %p108 = scmp.eq.s32.totalorder %s25, 3
      %p109 = por %p107, %p108
      %p110 = scmp.ne.s32.totalorder %s99, %s100
      %p111 = scmp.eq.s32.totalorder %s25, 0
      %p112 = por %p110, %p111
      %p113 = scmp.ne.s32.totalorder %s99, %s100
      %p114 = scmp.eq.s32.totalorder %s26, 3
      %p115 = por %p113, %p114
      %p117 = scmp.ne.s32.totalorder %s100, %s116
      %p118 = scmp.eq.s32.totalorder %s26, 0
      %p119 = por %p117, %p118
      %s121 = sadd.s32 %s120, 1
      %p124 = scmp.eq.s32.totalorder %s20, 3
      %p125 = scmp.ne.s32.totalorder %s120, %s122
      %p126 = scmp.eq.s32.totalorder %s20, 0
      %p127 = por %p125, %p126
      %p128 = scmp.ne.s32.totalorder %s120, %s122
      %p129 = scmp.eq.s32.totalorder %s25, 3
      %p130 = por %p128, %p129
      %p131 = scmp.ne.s32.totalorder %s122, %s123
      %p132 = scmp.eq.s32.totalorder %s25, 0
      %p133 = por %p131, %p132
      %p134 = scmp.ne.s32.totalorder %s122, %s123
      %p135 = scmp.eq.s32.totalorder %s26, 3
      %p136 = por %p134, %p135
      %p138 = scmp.ne.s32.totalorder %s123, %s137
      %p139 = scmp.eq.s32.totalorder %s26, 0
      %p140 = por %p138, %p139
      %s142 = sadd.s32 %s141, 1
      %p145 = scmp.eq.s32.totalorder %s20, 3
      %p146 = scmp.ne.s32.totalorder %s141, %s143
      %p147 = scmp.eq.s32.totalorder %s20, 0
      %p148 = por %p146, %p147
      %p149 = scmp.ne.s32.totalorder %s141, %s143
      %p150 = scmp.eq.s32.totalorder %s25, 3
      %p151 = por %p149, %p150
      %p152 = scmp.ne.s32.totalorder %s143, %s144
      %p153 = scmp.eq.s32.totalorder %s25, 0
      %p154 = por %p152, %p153
      %p155 = scmp.ne.s32.totalorder %s143, %s144
      %p156 = scmp.eq.s32.totalorder %s26, 3
      %p157 = por %p155, %p156
      %p159 = scmp.ne.s32.totalorder %s144, %s158
      %p160 = scmp.eq.s32.totalorder %s26, 0
      %p161 = por %p159, %p160
      %s162 = ssub.s32 %s27, %s39
      %s163 = ssub.s32 %s28, %s35
      %s164 = sor.u32 %s162, %s163
      %p165 = scmp.eq.s32.totalorder %s164, 0
      %s167 = sadd.s32 %s166, 1
      %s168 = scalar_select %p165, %s166, %s167
      %p171 = pneg %p165
      %p172 = scmp.eq.s32.totalorder %s20, 3
      %p173 = por %p171, %p172
      %p174 = scmp.ne.s32.totalorder %s166, %s169
      %p175 = scmp.eq.s32.totalorder %s20, 0
      %p176 = por %p174, %p175
      %p177 = scmp.ne.s32.totalorder %s166, %s169
      %p178 = scmp.eq.s32.totalorder %s25, 3
      %p179 = por %p177, %p178
      %p180 = scmp.ne.s32.totalorder %s169, %s170
      %p181 = scmp.eq.s32.totalorder %s25, 0
      %p182 = por %p180, %p181
      %p183 = scmp.ne.s32.totalorder %s169, %s170
      %p184 = scmp.eq.s32.totalorder %s26, 3
      %p185 = por %p183, %p184
      %p187 = scmp.ne.s32.totalorder %s170, %s186
      %p188 = scmp.eq.s32.totalorder %s26, 0
      %p189 = por %p187, %p188
      %s190 = ssub.s32 %s27, %s39
      %s191 = ssub.s32 %s28, %s35
      %s192 = sor.u32 %s190, %s191
      %p193 = scmp.eq.s32.totalorder %s192, 0
      %s195 = sadd.s32 %s194, 1
      %s196 = scalar_select %p193, %s194, %s195
      %p199 = pneg %p193
      %p200 = scmp.eq.s32.totalorder %s20, 3
      %p201 = por %p199, %p200
      %p202 = scmp.ne.s32.totalorder %s194, %s197
      %p203 = scmp.eq.s32.totalorder %s20, 0
      %p204 = por %p202, %p203
      %p205 = scmp.ne.s32.totalorder %s194, %s197
      %p206 = scmp.eq.s32.totalorder %s25, 3
      %p207 = por %p205, %p206
      %p208 = scmp.ne.s32.totalorder %s197, %s198
      %p209 = scmp.eq.s32.totalorder %s25, 0
      %p210 = por %p208, %p209
      %p211 = scmp.ne.s32.totalorder %s197, %s198
      %p212 = scmp.eq.s32.totalorder %s26, 3
      %p213 = por %p211, %p212
      %p215 = scmp.ne.s32.totalorder %s198, %s214
      %p216 = scmp.eq.s32.totalorder %s26, 0
      %p217 = por %p215, %p216
      %s218 = ssub.s32 %s27, %s39
      %s219 = ssub.s32 %s28, %s35
      %s220 = sor.u32 %s218, %s219
      %p221 = scmp.eq.s32.totalorder %s220, 0
      %s223 = sadd.s32 %s222, 1
      %s224 = scalar_select %p221, %s222, %s223
      %p227 = pneg %p221
      %p228 = scmp.eq.s32.totalorder %s20, 3
      %p229 = por %p227, %p228
      %p230 = scmp.ne.s32.totalorder %s222, %s225
      %p231 = scmp.eq.s32.totalorder %s20, 0
      %p232 = por %p230, %p231
      %p233 = scmp.ne.s32.totalorder %s222, %s225
      %p234 = scmp.eq.s32.totalorder %s25, 3
      %p235 = por %p233, %p234
      %p236 = scmp.ne.s32.totalorder %s225, %s226
      %p237 = scmp.eq.s32.totalorder %s25, 0
      %p238 = por %p236, %p237
      %p239 = scmp.ne.s32.totalorder %s225, %s226
      %p240 = scmp.eq.s32.totalorder %s26, 3
      %p241 = por %p239, %p240
      %p243 = scmp.ne.s32.totalorder %s226, %s242
      %p244 = scmp.eq.s32.totalorder %s26, 0
      %p245 = por %p243, %p244
      %p246 = scmp.le.s32.totalorder 1, %s20
      %p247 = scmp.lt.s32.totalorder %s20, 5
      %p248 = pnand %p246, %p247
      %p249 = pneg %p248
      // Predicated region
      $region9: #{tpu_custom_call.1} parent=5 // pred_check
        _
      $region10: #{tpu_custom_call.1} parent=5 // pred_check_branch
        %251 = sbr.rel (%p248) target = $region12
      $region11: #{tpu_custom_call.1} parent=5 // pred_region
        %s252 = ssub.s32 %s20, 1
        // Predicated region
        $region13: #{tpu_custom_call.1} parent=11 // pred_check
          %p253 = pneg %p133
        $region14: #{tpu_custom_call.1} parent=11 // pred_check_branch
          %255 = sbr.rel (%p253) target = $region16
        $region15: #{tpu_custom_call.1} parent=11 // pred_region
          _
        $region16: #{tpu_custom_call.1} parent=11 // pred_fallthru
          _
        // Predicated region
        $region17: #{tpu_custom_call.1} parent=11 // pred_check
          %p256 = pneg %p154
        $region18: #{tpu_custom_call.1} parent=11 // pred_check_branch
          %258 = sbr.rel (%p256) target = $region20
        $region19: #{tpu_custom_call.1} parent=11 // pred_region
          _
        $region20: #{tpu_custom_call.1} parent=11 // pred_fallthru
          _
      $region12: #{tpu_custom_call.1} parent=5 // pred_fallthru
        _
      %p259 = scmp.lt.s32.totalorder %s20, 4
      // Predicated region
      $region21: #{tpu_custom_call.1} parent=5 // pred_check
        %p260 = pneg %p259
      $region22: #{tpu_custom_call.1} parent=5 // pred_check_branch
        %262 = sbr.rel (%p260) target = $region24
      $region23: #{tpu_custom_call.1} parent=5 // pred_region
        // Predicated region
        $region25: #{tpu_custom_call.1} parent=23 // pred_check
          %p263 = pneg %p54
        $region26: #{tpu_custom_call.1} parent=23 // pred_check_branch
          %265 = sbr.rel (%p263) target = $region28
        $region27: #{tpu_custom_call.1} parent=23 // pred_region
          %p266 = scmp.lt.s32.totalorder %s27, 1
          %s267 = scalar_select %p266, %s27, 1
          %p268 = scmp.lt.s32.totalorder %s28, 1
          %s269 = scalar_select %p268, %s28, 1
          %s270 = smul.addr %s269, 6
          %s271 = smul.addr %s267, 12
          %s272 = sadd.s32 %s270, %s271
          %s273 = smul.addr %s272, 4
          %s274 = scalar_lea.vmem %s0, %s273
        $region28: #{tpu_custom_call.1} parent=23 // pred_fallthru
          _
        // Predicated region
        $region29: #{tpu_custom_call.1} parent=23 // pred_check
          %p275 = pneg %p80
        $region30: #{tpu_custom_call.1} parent=23 // pred_check_branch
          %277 = sbr.rel (%p275) target = $region32
        $region31: #{tpu_custom_call.1} parent=23 // pred_region
          %p278 = scmp.lt.s32.totalorder %s27, 1
          %s279 = scalar_select %p278, %s27, 1
          %s280 = scalar_lea.vmem %s1, %s279
        $region32: #{tpu_custom_call.1} parent=23 // pred_fallthru
          _
        // Predicated region
        $region33: #{tpu_custom_call.1} parent=23 // pred_check
          %p281 = pneg %p106
        $region34: #{tpu_custom_call.1} parent=23 // pred_check_branch
          %283 = sbr.rel (%p281) target = $region36
        $region35: #{tpu_custom_call.1} parent=23 // pred_region
          %p284 = scmp.lt.s32.totalorder %s27, 1
          %s285 = scalar_select %p284, %s27, 1
          %s286 = scalar_lea.vmem %s2, %s285
        $region36: #{tpu_custom_call.1} parent=23 // pred_fallthru
          _
      $region24: #{tpu_custom_call.1} parent=5 // pred_fallthru
        _
      %p287 = scmp.le.s32.totalorder 1, %s20
      %p288 = scmp.lt.s32.totalorder %s20, 5
      %p289 = pnand %p287, %p288
      %p290 = pneg %p289
      // Predicated region
      $region37: #{tpu_custom_call.1} parent=5 // pred_check
        _
      $region38: #{tpu_custom_call.1} parent=5 // pred_check_branch
        %292 = sbr.rel (%p289) target = $region40
      $region39: #{tpu_custom_call.1} parent=5 // pred_region
        %s293 = ssub.s32 %s20, 1
        %p294 = scmp.lt.s32.totalorder %s29, 1
        %s295 = scalar_select %p294, %s29, 1
        %p296 = scmp.lt.s32.totalorder %s30, 1
        %s297 = scalar_select %p296, %s30, 1
        %s298 = smul.addr %s297, 6
        %s299 = smul.addr %s295, 12
        %s300 = sadd.s32 %s298, %s299
        %s301 = smul.addr %s300, 4
        %s302 = scalar_lea.vmem %s0, %s301
        %p303 = pneg %p60
        %p304 = pneg %p57
        %p305 = scmp.lt.s32.totalorder %s29, 1
        %s306 = scalar_select %p305, %s29, 1
        %s307 = scalar_lea.vmem %s1, %s306
        %p308 = pneg %p86
        %p309 = pneg %p83
        %p310 = scmp.lt.s32.totalorder %s29, 1
        %s311 = scalar_select %p310, %s29, 1
        %s312 = scalar_lea.vmem %s2, %s311
        %p313 = pneg %p112
        %p314 = pneg %p109
        %p315 = pneg %p133
        %p316 = pneg %p130
        %p317 = pneg %p154
        %p318 = pneg %p151
        %p319 = pneg %p182
        %p320 = pneg %p179
        %s321 = sand.u32 %s169, 1
        %s322 = scalar_lea.sflag [#allocation4], %s321
        %s323 = sand.u32 %s169, 1
        %s324 = smul.addr %s323, 16
        %s325 = scalar_lea.vmem [#allocation3], %s324
        %p326 = pneg %p210
        %p327 = pneg %p207
        %s328 = sand.u32 %s25, 1
        %s329 = scalar_lea.sflag [#allocation6], %s328
        %s330 = sand.u32 %s197, 1
        %s331 = scalar_lea.vmem [#allocation5], %s330
        %p332 = pneg %p238
        %p333 = pneg %p235
        %s334 = sand.u32 %s25, 1
        %s335 = scalar_lea.sflag [#allocation6], %s334
        %s336 = sand.u32 %s225, 1
        %s337 = scalar_lea.vmem [#allocation7], %s336
        %p338 = scmp.lt.s32.totalorder %s29, 1
        %s339 = scalar_select %p338, %s29, 1
        %p340 = scmp.lt.s32.totalorder %s30, 1
        %s341 = scalar_select %p340, %s30, 1
        %s342 = smul.addr %s341, 6
        %s343 = smul.addr %s339, 12
        %s344 = sadd.s32 %s342, %s343
        %s345 = smul.addr %s344, 4
        %s346 = scalar_lea.vmem %s0, %s345
        %p347 = scmp.lt.s32.totalorder %s29, 1
        %s348 = scalar_select %p347, %s29, 1
        %s349 = scalar_lea.vmem %s1, %s348
        %p350 = scmp.lt.s32.totalorder %s29, 1
        %s351 = scalar_select %p350, %s29, 1
        %s352 = scalar_lea.vmem %s2, %s351
        %s353 = smul.u32 4, %s30
        %v356 = vld [vmem:[%s346] sm:$0xf]
        %v357 = vld [vmem:[%s346 + $0x4] sm:$0xf]
        %v358 = vld [vmem:[%s346 + $0x8] sm:$0xf]
        %v359 = vld [vmem:[%s346 + $0xc] sm:$0xf]
        %v360 = vld [vmem:[%s346 + $0x10] sm:$0xf]
        %v361 = vld [vmem:[%s346 + $0x14] sm:$0xf]
        %v362 = vunpack.c.l.bf16 %v356
        %v363 = vunpack.c.l.bf16 %v357
        %v364 = vunpack.c.l.bf16 %v358
        %v365 = vunpack.c.l.bf16 %v359
        %v366 = vunpack.c.l.bf16 %v360
        %v367 = vunpack.c.l.bf16 %v361
        %v368 = vld [vmem:[%s349] sm:$0x1]
        %v370 = vlaneseq
        %v371 = vshrl.u32 %v370, 7
        %v372 = vsub.s32 0, %v371
        %v373 = vrot.slane %v368, %v372
        %v375 = vmul.f32 %v362, %v373
        %v376 = vmul.f32 %v363, %v373
        %v377 = vmul.f32 %v364, %v373
        %v378 = vmul.f32 %v365, %v373
        %v379 = vmul.f32 %v366, %v373
        %v380 = vmul.f32 %v367, %v373
        %v381 = vld [vmem:[%s352] sm:$0x1]
        %v383 = vlaneseq
        %v384 = vshrl.u32 %v383, 7
        %v385 = vsub.s32 0, %v384
        %v386 = vrot.slane %v381, %v385
        %v388 = vadd.f32 %v375, %v386
        %v389 = vadd.f32 %v376, %v386
        %v390 = vadd.f32 %v377, %v386
        %v391 = vadd.f32 %v378, %v386
        %v392 = vadd.f32 %v379, %v386
        %v393 = vadd.f32 %v380, %v386
        %v394 = vsub.f32 0.0, %v388
        %v395 = vsub.f32 0.0, %v389
        %v396 = vsub.f32 0.0, %v390
        %v397 = vsub.f32 0.0, %v391
        %v398 = vsub.f32 0.0, %v392
        %v399 = vsub.f32 0.0, %v393
        %v400 = vmul.f32 %v394, 1.442695
        %v401 = vpow.pop %v400
        %v402 = vmul.f32 %v395, 1.442695
        %v403 = vpow.pop %v402
        %v404 = vmul.f32 %v396, 1.442695
        %v405 = vpow.pop %v404
        %v406 = vmul.f32 %v397, 1.442695
        %v407 = vpow.pop %v406
        %v408 = vmul.f32 %v398, 1.442695
        %v409 = vpow.pop %v408
        %v410 = vmul.f32 %v399, 1.442695
        %v411 = vpow.pop %v410
        %v412 = vadd.f32 %v401, 1.0
        %v413 = vadd.f32 %v403, 1.0
        %v414 = vadd.f32 %v405, 1.0
        %v415 = vadd.f32 %v407, 1.0
        %v416 = vadd.f32 %v409, 1.0
        %v417 = vadd.f32 %v411, 1.0
        %v418 = vrcp.pop %v412
        %v419 = vrcp.pop %v413
        %v420 = vrcp.pop %v414
        %v421 = vrcp.pop %v415
        %v422 = vrcp.pop %v416
        %v423 = vrcp.pop %v417
        %v424 = vmul.f32 %v388, %v418
        %v425 = vmul.f32 %v389, %v419
        %v426 = vmul.f32 %v390, %v420
        %v427 = vmul.f32 %v391, %v421
        %v428 = vmul.f32 %v392, %v422
        %v429 = vmul.f32 %v393, %v423
        %v430 = vlaneseq
        %v431 = vshrl.u32 %v430, 7
        %v432 = vadd.s32 %v431, 8
        %v433 = vadd.s32 %v431, 16
        %v434 = vadd.s32 %v431, 24
        %v435 = vadd.s32 %v431, 32
        %v436 = vadd.s32 %v431, 40
        %p437 = scmp.gt.s32.totalorder %s30, 0
        %vm438 = vcmp.ge.s32.totalorder %v431, 8
        %vm439 = vcmp.ge.s32.totalorder %v432, 8
        %vm440 = vcmp.ge.s32.totalorder %v433, 8
        %vm441 = vcmp.ge.s32.totalorder %v434, 8
        %vm442 = vcmp.ge.s32.totalorder %v435, 8
        %vm443 = vcmp.ge.s32.totalorder %v436, 8
        %s444 = scalar_select %p437, 1, 0
        %v445 = vstv %s444
        %vm446 = vcmp.eq.s32.totalorder %v445, 1
        %vm447 = vmor %vm446, %vm438
        %vm448 = vmor %vm446, %vm439
        %vm449 = vmor %vm446, %vm440
        %vm450 = vmor %vm446, %vm441
        %vm451 = vmor %vm446, %vm442
        %vm452 = vmor %vm446, %vm443
        %p453 = scmp.lt.s32.totalorder %s30, 1
        %vm454 = vcmp.lt.s32.totalorder %v431, 40
        %vm455 = vcmp.lt.s32.totalorder %v432, 40
        %vm456 = vcmp.lt.s32.totalorder %v433, 40
        %vm457 = vcmp.lt.s32.totalorder %v434, 40
        %vm458 = vcmp.lt.s32.totalorder %v435, 40
        %vm459 = vcmp.lt.s32.totalorder %v436, 40
        %s460 = scalar_select %p453, 1, 0
        %v461 = vstv %s460
        %vm462 = vcmp.eq.s32.totalorder %v461, 1
        %vm463 = vmor %vm462, %vm454
        %vm464 = vmor %vm462, %vm455
        %vm465 = vmor %vm462, %vm456
        %vm466 = vmor %vm462, %vm457
        %vm467 = vmor %vm462, %vm458
        %vm468 = vmor %vm462, %vm459
        %vm469 = vmand %vm447, %vm463
        %vm470 = vmand %vm448, %vm464
        %vm471 = vmand %vm449, %vm465
        %vm472 = vmand %vm450, %vm466
        %vm473 = vmand %vm451, %vm467
        %vm474 = vmand %vm452, %vm468
        %v475 = vsel %vm469, 1, 0
        %v476 = vsel %vm470, 1, 0
        %v477 = vsel %vm471, 1, 0
        %v478 = vsel %vm472, 1, 0
        %v479 = vsel %vm473, 1, 0
        %v480 = vsel %vm474, 1, 0
        %vm481 = vcmp.eq.s32.totalorder %v475, 1
        %vm482 = vcmp.eq.s32.totalorder %v476, 1
        %vm483 = vcmp.eq.s32.totalorder %v477, 1
        %vm484 = vcmp.eq.s32.totalorder %v478, 1
        %vm485 = vcmp.eq.s32.totalorder %v479, 1
        %vm486 = vcmp.eq.s32.totalorder %v480, 1
        %v487 = vsel %vm481, %v424, 0.0
        %v488 = vsel %vm482, %v425, 0.0
        %v489 = vsel %vm483, %v426, 0.0
        %v490 = vsel %vm484, %v427, 0.0
        %v491 = vsel %vm485, %v428, 0.0
        %v492 = vsel %vm486, %v429, 0.0
        %vm493 = vcmp.lt.s32.totalorder %v431, 0
        %v494 = vsub.s32 0, %v431
        %v495 = vsel %vm493, %v494, %v431
        %v496 = vshrl.u32 %v495, 3
        %v497 = vand.u32 %v495, 7
        %v498 = vsub.s32 0, %v497
        %v499 = vsel %vm493, %v498, %v497
        %vm500 = vcmp.lt.s32.totalorder %v432, 0
        %v501 = vsub.s32 0, %v432
        %v502 = vsel %vm500, %v501, %v432
        %v503 = vshrl.u32 %v502, 3
        %v504 = vand.u32 %v502, 7
        %v505 = vsub.s32 0, %v504
        %v506 = vsel %vm500, %v505, %v504
        %vm507 = vcmp.lt.s32.totalorder %v433, 0
        %v508 = vsub.s32 0, %v433
        %v509 = vsel %vm507, %v508, %v433
        %v510 = vshrl.u32 %v509, 3
        %v511 = vand.u32 %v509, 7
        %v512 = vsub.s32 0, %v511
        %v513 = vsel %vm507, %v512, %v511
        %vm514 = vcmp.lt.s32.totalorder %v434, 0
        %v515 = vsub.s32 0, %v434
        %v516 = vsel %vm514, %v515, %v434
        %v517 = vshrl.u32 %v516, 3
        %v518 = vand.u32 %v516, 7
        %v519 = vsub.s32 0, %v518
        %v520 = vsel %vm514, %v519, %v518
        %vm521 = vcmp.lt.s32.totalorder %v435, 0
        %v522 = vsub.s32 0, %v435
        %v523 = vsel %vm521, %v522, %v435
        %v524 = vshrl.u32 %v523, 3
        %v525 = vand.u32 %v523, 7
        %v526 = vsub.s32 0, %v525
        %v527 = vsel %vm521, %v526, %v525
        %vm528 = vcmp.lt.s32.totalorder %v436, 0
        %v529 = vsub.s32 0, %v436
        %v530 = vsel %vm528, %v529, %v436
        %v531 = vshrl.u32 %v530, 3
        %v532 = vand.u32 %v530, 7
        %v533 = vsub.s32 0, %v532
        %v534 = vsel %vm528, %v533, %v532
        %vm535 = vcmp.ne.s32.totalorder %v499, 0
        %vm536 = vcmp.ne.s32.totalorder %v506, 0
        %vm537 = vcmp.ne.s32.totalorder %v513, 0
        %vm538 = vcmp.ne.s32.totalorder %v520, 0
        %vm539 = vcmp.ne.s32.totalorder %v527, 0
        %vm540 = vcmp.ne.s32.totalorder %v534, 0
        %vm541 = vcmp.lt.s32.totalorder %v499, 0
        %vm542 = vcmp.lt.s32.totalorder %v506, 0
        %vm543 = vcmp.lt.s32.totalorder %v513, 0
        %vm544 = vcmp.lt.s32.totalorder %v520, 0
        %vm545 = vcmp.lt.s32.totalorder %v527, 0
        %vm546 = vcmp.lt.s32.totalorder %v534, 0
        %vm547 = vmand %vm541, %vm535
        %vm548 = vmand %vm542, %vm536
        %vm549 = vmand %vm543, %vm537
        %vm550 = vmand %vm544, %vm538
        %vm551 = vmand %vm545, %vm539
        %vm552 = vmand %vm546, %vm540
        %v553 = vadd.s32 %v499, 8
        %v554 = vadd.s32 %v506, 8
        %v555 = vadd.s32 %v513, 8
        %v556 = vadd.s32 %v520, 8
        %v557 = vadd.s32 %v527, 8
        %v558 = vadd.s32 %v534, 8
        %v559 = vsel %vm547, %v553, %v499
        %v560 = vsel %vm548, %v554, %v506
        %v561 = vsel %vm549, %v555, %v513
        %v562 = vsel %vm550, %v556, %v520
        %v563 = vsel %vm551, %v557, %v527
        %v564 = vsel %vm552, %v558, %v534
        %vm565 = vcmp.gt.s32.totalorder %v559, 0
        %vm566 = vcmp.gt.s32.totalorder %v560, 0
        %vm567 = vcmp.gt.s32.totalorder %v561, 0
        %vm568 = vcmp.gt.s32.totalorder %v562, 0
        %vm569 = vcmp.gt.s32.totalorder %v563, 0
        %vm570 = vcmp.gt.s32.totalorder %v564, 0
        %v571 = vrot.slane %v487, 7
        %v572 = vrot.slane %v488, 7
        %v573 = vrot.slane %v489, 7
        %v574 = vrot.slane %v490, 7
        %v575 = vrot.slane %v491, 7
        %v576 = vrot.slane %v492, 7
        %vm577 = vcmp.lt.s32.totalorder %v431, 1
        %v578 = vsel %vm577, %v575, %v576
        %v579 = vsel %vm577, %v574, %v575
        %v580 = vsel %vm577, %v573, %v574
        %v581 = vsel %vm577, %v572, %v573
        %v582 = vsel %vm577, %v571, %v572
        %v583 = vsel %vm577, %v576, %v571
        %v584 = vsel %vm565, 1, 0
        %v585 = vsel %vm566, 1, 0
        %v586 = vsel %vm567, 1, 0
        %v587 = vsel %vm568, 1, 0
        %v588 = vsel %vm569, 1, 0
        %v589 = vsel %vm570, 1, 0
        %vm590 = vcmp.eq.s32.totalorder %v584, 1
        %vm591 = vcmp.eq.s32.totalorder %v585, 1
        %vm592 = vcmp.eq.s32.totalorder %v586, 1
        %vm593 = vcmp.eq.s32.totalorder %v587, 1
        %vm594 = vcmp.eq.s32.totalorder %v588, 1
        %vm595 = vcmp.eq.s32.totalorder %v589, 1
        %v596 = vsel %vm590, %v583, 0.0
        %v597 = vsel %vm591, %v582, 0.0
        %v598 = vsel %vm592, %v581, 0.0
        %v599 = vsel %vm593, %v580, 0.0
        %v600 = vsel %vm594, %v579, 0.0
        %v601 = vsel %vm595, %v578, 0.0
        %vm602 = vcmp.lt.s32.totalorder %v559, 7
        %vm603 = vcmp.lt.s32.totalorder %v560, 7
        %vm604 = vcmp.lt.s32.totalorder %v561, 7
        %vm605 = vcmp.lt.s32.totalorder %v562, 7
        %vm606 = vcmp.lt.s32.totalorder %v563, 7
        %vm607 = vcmp.lt.s32.totalorder %v564, 7
        %v608 = vrot.slane %v487, 1
        %v609 = vrot.slane %v488, 1
        %v610 = vrot.slane %v489, 1
        %v611 = vrot.slane %v490, 1
        %v612 = vrot.slane %v491, 1
        %v613 = vrot.slane %v492, 1
        %vm614 = vcmp.lt.s32.totalorder %v431, 7
        %v615 = vsel %vm614, %v612, %v613
        %v616 = vsel %vm614, %v611, %v612
        %v617 = vsel %vm614, %v610, %v611
        %v618 = vsel %vm614, %v609, %v610
        %v619 = vsel %vm614, %v608, %v609
        %v620 = vsel %vm614, %v613, %v608
        %v621 = vsel %vm602, 1, 0
        %v622 = vsel %vm603, 1, 0
        %v623 = vsel %vm604, 1, 0
        %v624 = vsel %vm605, 1, 0
        %v625 = vsel %vm606, 1, 0
        %v626 = vsel %vm607, 1, 0
        %vm627 = vcmp.eq.s32.totalorder %v621, 1
        %vm628 = vcmp.eq.s32.totalorder %v622, 1
        %vm629 = vcmp.eq.s32.totalorder %v623, 1
        %vm630 = vcmp.eq.s32.totalorder %v624, 1
        %vm631 = vcmp.eq.s32.totalorder %v625, 1
        %vm632 = vcmp.eq.s32.totalorder %v626, 1
        %v633 = vsel %vm627, %v619, 0.0
        %v634 = vsel %vm628, %v618, 0.0
        %v635 = vsel %vm629, %v617, 0.0
        %v636 = vsel %vm630, %v616, 0.0
        %v637 = vsel %vm631, %v615, 0.0
        %v638 = vsel %vm632, %v620, 0.0
        %v639 = vpack.c.bf16 %v597, %v596
        %v640 = vpack.c.bf16 %v599, %v598
        %v641 = vpack.c.bf16 %v601, %v600
        %v645 = vunpack.c.l.b16 %v639
        %v646 = vunpack.c.h.b16 %v639
        %v647 = vunpack.c.l.b16 %v640
        %v648 = vunpack.c.h.b16 %v640
        %v649 = vunpack.c.l.b16 %v641
        %v650 = vunpack.c.h.b16 %v641
        %v651 = vpack.c.b16 %v645, %v645
        %v652 = vpack.c.b16 %v646, %v646
        %v653 = vpack.c.b16 %v647, %v647
        %v654 = vpack.c.b16 %v648, %v648
        %v655 = vpack.c.b16 %v649, %v649
        %v656 = vpack.c.b16 %v650, %v650
        %vm663 = vcmask 257024
        %664 = vst.msk [vmem:[#allocation2] sm:$0xf] %vm663, %v651
        %665 = vst.msk [vmem:[#allocation2 + $0x4] sm:$0xf] %vm663, %v652
        %666 = vst.msk [vmem:[#allocation2 + $0x8] sm:$0xf] %vm663, %v653
        %667 = vst.msk [vmem:[#allocation2 + $0xc] sm:$0xf] %vm663, %v654
        %668 = vst.msk [vmem:[#allocation2 + $0x10] sm:$0xf] %vm663, %v655
        %669 = vst.msk [vmem:[#allocation2 + $0x14] sm:$0xf] %vm663, %v656
        %v670 = vpack.c.bf16 %v488, %v487
        %v671 = vpack.c.bf16 %v490, %v489
        %v672 = vpack.c.bf16 %v492, %v491
        %v676 = vunpack.c.l.b16 %v670
        %v677 = vunpack.c.h.b16 %v670
        %v678 = vunpack.c.l.b16 %v671
        %v679 = vunpack.c.h.b16 %v671
        %v680 = vunpack.c.l.b16 %v672
        %v681 = vunpack.c.h.b16 %v672
        %v682 = vpack.c.b16 %v676, %v676
        %v683 = vpack.c.b16 %v677, %v677
        %v684 = vpack.c.b16 %v678, %v678
        %v685 = vpack.c.b16 %v679, %v679
        %v686 = vpack.c.b16 %v680, %v680
        %v687 = vpack.c.b16 %v681, %v681
        %688 = vrot.lane.b32.xlu0 %v682, 32
        %v689 = vpop.permute.xlu0 %688
        %690 = vrot.lane.b32.xlu0 %v683, 32
        %v691 = vpop.permute.xlu0 %690
        %692 = vrot.lane.b32.xlu0 %v684, 32
        %v693 = vpop.permute.xlu0 %692
        %694 = vrot.lane.b32.xlu0 %v685, 32
        %v695 = vpop.permute.xlu0 %694
        %696 = vrot.lane.b32.xlu0 %v686, 32
        %v697 = vpop.permute.xlu0 %696
        %698 = vrot.lane.b32.xlu0 %v687, 32
        %v699 = vpop.permute.xlu0 %698
        %vm706 = vcmask 519424
        %707 = vst.msk [vmem:[#allocation2] sm:$0xf] %vm706, %v689
        %708 = vst.msk [vmem:[#allocation2 + $0x4] sm:$0xf] %vm706, %v691
        %709 = vst.msk [vmem:[#allocation2 + $0x8] sm:$0xf] %vm706, %v693
        %710 = vst.msk [vmem:[#allocation2 + $0xc] sm:$0xf] %vm706, %v695
        %711 = vst.msk [vmem:[#allocation2 + $0x10] sm:$0xf] %vm706, %v697
        %712 = vst.msk [vmem:[#allocation2 + $0x14] sm:$0xf] %vm706, %v699
        %v713 = vpack.c.bf16 %v634, %v633
        %v714 = vpack.c.bf16 %v636, %v635
        %v715 = vpack.c.bf16 %v638, %v637
        %v719 = vunpack.c.l.b16 %v713
        %v720 = vunpack.c.h.b16 %v713
        %v721 = vunpack.c.l.b16 %v714
        %v722 = vunpack.c.h.b16 %v714
        %v723 = vunpack.c.l.b16 %v715
        %v724 = vunpack.c.h.b16 %v715
        %v725 = vpack.c.b16 %v719, %v719
        %v726 = vpack.c.b16 %v720, %v720
        %v727 = vpack.c.b16 %v721, %v721
        %v728 = vpack.c.b16 %v722, %v722
        %v729 = vpack.c.b16 %v723, %v723
        %v730 = vpack.c.b16 %v724, %v724
        %731 = vrot.lane.b32.xlu0 %v725, 64
        %v732 = vpop.permute.xlu0 %731
        %733 = vrot.lane.b32.xlu0 %v726, 64
        %v734 = vpop.permute.xlu0 %733
        %735 = vrot.lane.b32.xlu0 %v727, 64
        %v736 = vpop.permute.xlu0 %735
        %737 = vrot.lane.b32.xlu0 %v728, 64
        %v738 = vpop.permute.xlu0 %737
        %739 = vrot.lane.b32.xlu0 %v729, 64
        %v740 = vpop.permute.xlu0 %739
        %741 = vrot.lane.b32.xlu0 %v730, 64
        %v742 = vpop.permute.xlu0 %741
        %vm749 = vcmask 781824
        %750 = vst.msk [vmem:[#allocation2] sm:$0xf] %vm749, %v732
        %751 = vst.msk [vmem:[#allocation2 + $0x4] sm:$0xf] %vm749, %v734
        %752 = vst.msk [vmem:[#allocation2 + $0x8] sm:$0xf] %vm749, %v736
        %753 = vst.msk [vmem:[#allocation2 + $0xc] sm:$0xf] %vm749, %v738
        %754 = vst.msk [vmem:[#allocation2 + $0x10] sm:$0xf] %vm749, %v740
        %755 = vst.msk [vmem:[#allocation2 + $0x14] sm:$0xf] %vm749, %v742
        %v756 = vld [vmem:[#allocation2] sm:$0xf]
        %v757 = vld [vmem:[#allocation2 + $0x4] sm:$0xf]
        %v758 = vld [vmem:[#allocation2 + $0x8] sm:$0xf]
        %v759 = vld [vmem:[#allocation2 + $0xc] sm:$0xf]
        %v760 = vld [vmem:[%s3] sm:$0xf]
        %v761 = vld [vmem:[%s3 + $0x4] sm:$0xf]
        %v762 = vld [vmem:[%s3 + $0x8] sm:$0xf]
        %v763 = vld [vmem:[%s3 + $0xc] sm:$0xf]
        %v764 = vld [vmem:[%s3 + $0x10] sm:$0xf]
        %v765 = vld [vmem:[%s3 + $0x14] sm:$0xf]
        %v766 = vld [vmem:[%s3 + $0x18] sm:$0xf]
        %v767 = vld [vmem:[%s3 + $0x1c] sm:$0xf]
        %v768 = vld [vmem:[%s3 + $0x20] sm:$0xf]
        %v769 = vld [vmem:[%s3 + $0x24] sm:$0xf]
        %v770 = vld [vmem:[%s3 + $0x28] sm:$0xf]
        %v771 = vld [vmem:[%s3 + $0x2c] sm:$0xf]
        %v772 = vld [vmem:[#allocation2 + $0x10] sm:$0xf]
        %s773 = scalar_lea.vmem %s3, 48
        %v774 = vld [vmem:[%s773] sm:$0xf]
        %v775 = vld [vmem:[%s773 + $0x4] sm:$0xf]
        %v776 = vld [vmem:[%s773 + $0x8] sm:$0xf]
        %v777 = vld [vmem:[%s773 + $0xc] sm:$0xf]
        %v778 = vld [vmem:[%s773 + $0x10] sm:$0xf]
        %v779 = vld [vmem:[%s773 + $0x14] sm:$0xf]
        %v780 = vld [vmem:[%s773 + $0x18] sm:$0xf]
        %v781 = vld [vmem:[%s773 + $0x1c] sm:$0xf]
        %v782 = vld [vmem:[%s773 + $0x20] sm:$0xf]
        %v783 = vld [vmem:[%s773 + $0x24] sm:$0xf]
        %v784 = vld [vmem:[%s773 + $0x28] sm:$0xf]
        %v785 = vld [vmem:[%s773 + $0x2c] sm:$0xf]
        %v790 = vunpack.c.l.b16 %v757
        %v791 = vunpack.c.l.b16 %v758
        %v792 = vunpack.c.l.b16 %v759
        %v793 = vunpack.c.l.b16 %v772
        %v794 = vpack.c.b16 %v791, %v790
        %v795 = vpack.c.b16 %v793, %v792
        %v808 = vunpack.c.l.b16 %v774
        %v809 = vunpack.c.l.b16 %v775
        %v810 = vunpack.c.l.b16 %v776
        %v811 = vunpack.c.l.b16 %v777
        %v812 = vunpack.c.l.b16 %v778
        %v813 = vunpack.c.l.b16 %v779
        %v814 = vunpack.c.l.b16 %v780
        %v815 = vunpack.c.l.b16 %v781
        %v816 = vunpack.c.l.b16 %v782
        %v817 = vunpack.c.l.b16 %v783
        %v818 = vunpack.c.l.b16 %v784
        %v819 = vunpack.c.l.b16 %v785
        %v820 = vpack.c.b16 %v809, %v808
        %v821 = vpack.c.b16 %v811, %v810
        %v822 = vpack.c.b16 %v813, %v812
        %v823 = vpack.c.b16 %v815, %v814
        %v824 = vpack.c.b16 %v817, %v816
        %v825 = vpack.c.b16 %v819, %v818
        %vm832 = vcmask 785408
        %v834 = vsel %vm832, %v794, 0
        %v837 = vsel %vm832, %v795, 0
        %839 = vmatprep.subr.bf16.mxu0 0
        %840 = vmatpush1.bf16.msra.mxu0 0
        %841 = vmatprep.subr.bf16.mxu0 0
        %842 = vmatpush1.bf16.msra.mxu0 0
        %843 = vmatprep.subr.bf16.mxu0 0
        %844 = vmatpush1.bf16.msra.mxu0 %v825
        %845 = vmatprep.subr.bf16.mxu0 0
        %846 = vmatpush1.bf16.msra.mxu0 %v824
        %847 = vmatprep.subr.bf16.mxu0 0
        %848 = vmatpush1.bf16.msra.mxu0 %v823
        %849 = vmatprep.subr.bf16.mxu0 0
        %850 = vmatpush1.bf16.msra.mxu0 %v822
        %851 = vmatprep.subr.bf16.mxu0 0
        %852 = vmatpush1.bf16.msra.mxu0 %v821
        %853 = vmatprep.subr.bf16.mxu0 0
        %854 = vmatpush1.bf16.msra.mxu0 %v820
        %855 = vmatprep.subr.bf16.mxu0 0
        %856 = vmatpush2.bf16.msra.mxu0 0
        %857 = vmatprep.subr.bf16.mxu0 0
        %858 = vmatpush2.bf16.msra.mxu0 0
        %859 = vmatprep.subr.bf16.mxu0 0
        %860 = vmatpush2.bf16.msra.mxu0 0
        %861 = vmatprep.subr.bf16.mxu0 0
        %862 = vmatpush2.bf16.msra.mxu0 0
        %863 = vmatprep.subr.bf16.mxu0 0
        %864 = vmatpush2.bf16.msra.mxu0 0
        %865 = vmatprep.subr.bf16.mxu0 0
        %866 = vmatpush2.bf16.msra.mxu0 0
        %867 = vmatprep.subr.bf16.mxu0 0
        %868 = vmatpush2.bf16.msra.mxu0 0
        %869 = vmatprep.subr.bf16.mxu0 0
        %870 = vmatpush2.bf16.msra.mxu0 0
        %871 = vmatprep.mubr.bf16.mxu0 0
        %872 = vmatmul.mubr.bf16.gmra.mxu0 %v834
        %v873 = vpop.f32.mrf.mxu0
        %v874 = vadd.f32 0.0, %v873
        %v875 = vpop.f32.mrf.mxu0
        %v876 = vpop.f32.mrf.mxu0
        %v877 = vadd.f32 0.0, %v876
        %v878 = vpop.f32.mrf.mxu0
        %879 = vmatprep.mubr.bf16.mxu0 0
        %880 = vmatmul.mubr.bf16.gmra.mxu0 %v837
        %v881 = vpop.f32.mrf.mxu0
        %v882 = vadd.f32 0.0, %v881
        %v883 = vpop.f32.mrf.mxu0
        %v884 = vpop.f32.mrf.mxu0
        %v885 = vadd.f32 0.0, %v884
        %v886 = vpop.f32.mrf.mxu0
        %887 = vdwg.mxu0
        %v889 = vunpack.c.l.b16 %v756
        %v890 = vpack.c.b16 %v790, %v889
        %v891 = vpack.c.b16 %v792, %v791
        %v904 = vunpack.c.l.b16 %v760
        %v905 = vunpack.c.l.b16 %v761
        %v906 = vunpack.c.l.b16 %v762
        %v907 = vunpack.c.l.b16 %v763
        %v908 = vunpack.c.l.b16 %v764
        %v909 = vunpack.c.l.b16 %v765
        %v910 = vunpack.c.l.b16 %v766
        %v911 = vunpack.c.l.b16 %v767
        %v912 = vunpack.c.l.b16 %v768
        %v913 = vunpack.c.l.b16 %v769
        %v914 = vunpack.c.l.b16 %v770
        %v915 = vunpack.c.l.b16 %v771
        %v916 = vpack.c.b16 %v905, %v904
        %v917 = vpack.c.b16 %v907, %v906
        %v918 = vpack.c.b16 %v909, %v908
        %v919 = vpack.c.b16 %v911, %v910
        %v920 = vpack.c.b16 %v913, %v912
        %v921 = vpack.c.b16 %v915, %v914
        %v929 = vsel %vm832, %v890, 0
        %v932 = vsel %vm832, %v891, 0
        %934 = vmatprep.subr.bf16.mxu0 0
        %935 = vmatpush1.bf16.msra.mxu0 0
        %936 = vmatprep.subr.bf16.mxu0 0
        %937 = vmatpush1.bf16.msra.mxu0 0
        %938 = vmatprep.subr.bf16.mxu0 0
        %939 = vmatpush1.bf16.msra.mxu0 %v921
        %940 = vmatprep.subr.bf16.mxu0 0
        %941 = vmatpush1.bf16.msra.mxu0 %v920
        %942 = vmatprep.subr.bf16.mxu0 0
        %943 = vmatpush1.bf16.msra.mxu0 %v919
        %944 = vmatprep.subr.bf16.mxu0 0
        %945 = vmatpush1.bf16.msra.mxu0 %v918
        %946 = vmatprep.subr.bf16.mxu0 0
        %947 = vmatpush1.bf16.msra.mxu0 %v917
        %948 = vmatprep.subr.bf16.mxu0 0
        %949 = vmatpush1.bf16.msra.mxu0 %v916
        %950 = vmatprep.subr.bf16.mxu0 0
        %951 = vmatpush2.bf16.msra.mxu0 0
        %952 = vmatprep.subr.bf16.mxu0 0
        %953 = vmatpush2.bf16.msra.mxu0 0
        %954 = vmatprep.subr.bf16.mxu0 0
        %955 = vmatpush2.bf16.msra.mxu0 0
        %956 = vmatprep.subr.bf16.mxu0 0
        %957 = vmatpush2.bf16.msra.mxu0 0
        %958 = vmatprep.subr.bf16.mxu0 0
        %959 = vmatpush2.bf16.msra.mxu0 0
        %960 = vmatprep.subr.bf16.mxu0 0
        %961 = vmatpush2.bf16.msra.mxu0 0
        %962 = vmatprep.subr.bf16.mxu0 0
        %963 = vmatpush2.bf16.msra.mxu0 0
        %964 = vmatprep.subr.bf16.mxu0 0
        %965 = vmatpush2.bf16.msra.mxu0 0
        %966 = vmatprep.mubr.bf16.mxu0 0
        %967 = vmatmul.mubr.bf16.gmra.mxu0 %v929
        %v968 = vpop.f32.mrf.mxu0
        %v969 = vadd.f32 %v874, %v968
        %v970 = vpop.f32.mrf.mxu0
        %v971 = vpop.f32.mrf.mxu0
        %v972 = vadd.f32 %v877, %v971
        %v973 = vpop.f32.mrf.mxu0
        %974 = vmatprep.mubr.bf16.mxu0 0
        %975 = vmatmul.mubr.bf16.gmra.mxu0 %v932
        %v976 = vpop.f32.mrf.mxu0
        %v977 = vadd.f32 %v882, %v976
        %v978 = vpop.f32.mrf.mxu0
        %v979 = vpop.f32.mrf.mxu0
        %v980 = vadd.f32 %v885, %v979
        %v981 = vpop.f32.mrf.mxu0
        %982 = vdwg.mxu0
        %v983 = vld [vmem:[#allocation2 + $0x8] sm:$0xf]
        %v984 = vld [vmem:[#allocation2 + $0xc] sm:$0xf]
        %v985 = vld [vmem:[#allocation2 + $0x10] sm:$0xf]
        %v986 = vld [vmem:[#allocation2 + $0x14] sm:$0xf]
        %s987 = scalar_lea.vmem %s3, 96
        %v988 = vld [vmem:[%s987] sm:$0xf]
        %v989 = vld [vmem:[%s987 + $0x4] sm:$0xf]
        %v990 = vld [vmem:[%s987 + $0x8] sm:$0xf]
        %v991 = vld [vmem:[%s987 + $0xc] sm:$0xf]
        %v992 = vld [vmem:[%s987 + $0x10] sm:$0xf]
        %v993 = vld [vmem:[%s987 + $0x14] sm:$0xf]
        %v994 = vld [vmem:[%s987 + $0x18] sm:$0xf]
        %v995 = vld [vmem:[%s987 + $0x1c] sm:$0xf]
        %v996 = vld [vmem:[%s987 + $0x20] sm:$0xf]
        %v997 = vld [vmem:[%s987 + $0x24] sm:$0xf]
        %v998 = vld [vmem:[%s987 + $0x28] sm:$0xf]
        %v999 = vld [vmem:[%s987 + $0x2c] sm:$0xf]
        %v1004 = vunpack.c.l.b16 %v983
        %v1005 = vunpack.c.l.b16 %v984
        %v1006 = vunpack.c.l.b16 %v985
        %v1007 = vunpack.c.l.b16 %v986
        %v1008 = vpack.c.b16 %v1005, %v1004
        %v1009 = vpack.c.b16 %v1007, %v1006
        %v1022 = vunpack.c.l.b16 %v988
        %v1023 = vunpack.c.l.b16 %v989
        %v1024 = vunpack.c.l.b16 %v990
        %v1025 = vunpack.c.l.b16 %v991
        %v1026 = vunpack.c.l.b16 %v992
        %v1027 = vunpack.c.l.b16 %v993
        %v1028 = vunpack.c.l.b16 %v994
        %v1029 = vunpack.c.l.b16 %v995
        %v1030 = vunpack.c.l.b16 %v996
        %v1031 = vunpack.c.l.b16 %v997
        %v1032 = vunpack.c.l.b16 %v998
        %v1033 = vunpack.c.l.b16 %v999
        %v1034 = vpack.c.b16 %v1023, %v1022
        %v1035 = vpack.c.b16 %v1025, %v1024
        %v1036 = vpack.c.b16 %v1027, %v1026
        %v1037 = vpack.c.b16 %v1029, %v1028
        %v1038 = vpack.c.b16 %v1031, %v1030
        %v1039 = vpack.c.b16 %v1033, %v1032
        %v1047 = vsel %vm832, %v1008, 0
        %v1050 = vsel %vm832, %v1009, 0
        %1052 = vmatprep.subr.bf16.mxu0 0
        %1053 = vmatpush1.bf16.msra.mxu0 0
        %1054 = vmatprep.subr.bf16.mxu0 0
        %1055 = vmatpush1.bf16.msra.mxu0 0
        %1056 = vmatprep.subr.bf16.mxu0 0
        %1057 = vmatpush1.bf16.msra.mxu0 %v1039
        %1058 = vmatprep.subr.bf16.mxu0 0
        %1059 = vmatpush1.bf16.msra.mxu0 %v1038
        %1060 = vmatprep.subr.bf16.mxu0 0
        %1061 = vmatpush1.bf16.msra.mxu0 %v1037
        %1062 = vmatprep.subr.bf16.mxu0 0
        %1063 = vmatpush1.bf16.msra.mxu0 %v1036
        %1064 = vmatprep.subr.bf16.mxu0 0
        %1065 = vmatpush1.bf16.msra.mxu0 %v1035
        %1066 = vmatprep.subr.bf16.mxu0 0
        %1067 = vmatpush1.bf16.msra.mxu0 %v1034
        %1068 = vmatprep.subr.bf16.mxu0 0
        %1069 = vmatpush2.bf16.msra.mxu0 0
        %1070 = vmatprep.subr.bf16.mxu0 0
        %1071 = vmatpush2.bf16.msra.mxu0 0
        %1072 = vmatprep.subr.bf16.mxu0 0
        %1073 = vmatpush2.bf16.msra.mxu0 0
        %1074 = vmatprep.subr.bf16.mxu0 0
        %1075 = vmatpush2.bf16.msra.mxu0 0
        %1076 = vmatprep.subr.bf16.mxu0 0
        %1077 = vmatpush2.bf16.msra.mxu0 0
        %1078 = vmatprep.subr.bf16.mxu0 0
        %1079 = vmatpush2.bf16.msra.mxu0 0
        %1080 = vmatprep.subr.bf16.mxu0 0
        %1081 = vmatpush2.bf16.msra.mxu0 0
        %1082 = vmatprep.subr.bf16.mxu0 0
        %1083 = vmatpush2.bf16.msra.mxu0 0
        %1084 = vmatprep.mubr.bf16.mxu0 0
        %1085 = vmatmul.mubr.bf16.gmra.mxu0 %v1047
        %v1086 = vpop.f32.mrf.mxu0
        %v1087 = vadd.f32 0.0, %v1086
        %v1088 = vpop.f32.mrf.mxu0
        %v1089 = vpop.f32.mrf.mxu0
        %v1090 = vadd.f32 0.0, %v1089
        %v1091 = vpop.f32.mrf.mxu0
        %1092 = vmatprep.mubr.bf16.mxu0 0
        %1093 = vmatmul.mubr.bf16.gmra.mxu0 %v1050
        %v1094 = vpop.f32.mrf.mxu0
        %v1095 = vadd.f32 0.0, %v1094
        %v1096 = vpop.f32.mrf.mxu0
        %v1097 = vpop.f32.mrf.mxu0
        %v1098 = vadd.f32 0.0, %v1097
        %v1099 = vpop.f32.mrf.mxu0
        %1100 = vdwg.mxu0
        %v1101 = vadd.f32 %v969, %v1087
        %v1102 = vadd.f32 %v972, %v1090
        %v1103 = vadd.f32 %v977, %v1095
        %v1104 = vadd.f32 %v980, %v1098
        %v1105 = vld [vmem:[%s4] sm:$0x1]
        %v1107 = vlaneseq
        %v1108 = vshrl.u32 %v1107, 7
        %v1109 = vsub.s32 0, %v1108
        %v1110 = vrot.slane %v1105, %v1109
        %v1112 = vadd.f32 %v1101, %v1110
        %v1113 = vadd.f32 %v1102, %v1110
        %v1114 = vadd.f32 %v1103, %v1110
        %v1115 = vadd.f32 %v1104, %v1110
        %v1116 = vpack.c.bf16 %v1113, %v1112
        %v1117 = vpack.c.bf16 %v1115, %v1114
        %v1120 = vunpack.c.l.b16 %v1116
        %v1121 = vunpack.c.h.b16 %v1116
        %v1122 = vunpack.c.l.b16 %v1117
        %v1123 = vunpack.c.h.b16 %v1117
        %v1124 = vpack.c.b16 %v1120, %v1120
        %v1125 = vpack.c.b16 %v1121, %v1121
        %v1126 = vpack.c.b16 %v1122, %v1122
        %v1127 = vpack.c.b16 %v1123, %v1123
        %vm1132 = vcmask 519168
        %1133 = vst.msk [vmem:[%s325] sm:$0xf] %vm1132, %v1124
        %1134 = vst.msk [vmem:[%s325 + $0x4] sm:$0xf] %vm1132, %v1125
        %1135 = vst.msk [vmem:[%s325 + $0x8] sm:$0xf] %vm1132, %v1126
        %1136 = vst.msk [vmem:[%s325 + $0xc] sm:$0xf] %vm1132, %v1127
        %vm1137 = vcmask 261120
        %v1139 = vsel %vm1137, 1065369472, 0
        %1141 = vmatprep.subr.bf16.mxu0 0
        %1142 = vmatpush1.bf16.msra.mxu0 0
        %1143 = vmatprep.subr.bf16.mxu0 0
        %1144 = vmatpush1.bf16.msra.mxu0 0
        %1145 = vmatprep.subr.bf16.mxu0 0
        %1146 = vmatpush1.bf16.msra.mxu0 0
        %1147 = vmatprep.subr.bf16.mxu0 0
        %1148 = vmatpush1.bf16.msra.mxu0 0
        %1149 = vmatprep.subr.bf16.mxu0 0
        %1150 = vmatpush1.bf16.msra.mxu0 0
        %1151 = vmatprep.subr.bf16.mxu0 0
        %1152 = vmatpush1.bf16.msra.mxu0 0
        %1153 = vmatprep.subr.bf16.mxu0 0
        %1154 = vmatpush1.bf16.msra.mxu0 %v1117
        %1155 = vmatprep.subr.bf16.mxu0 0
        %1156 = vmatpush1.bf16.msra.mxu0 %v1116
        %1157 = vmatprep.subr.bf16.mxu0 0
        %1158 = vmatpush2.bf16.msra.mxu0 0
        %1159 = vmatprep.subr.bf16.mxu0 0
        %1160 = vmatpush2.bf16.msra.mxu0 0
        %1161 = vmatprep.subr.bf16.mxu0 0
        %1162 = vmatpush2.bf16.msra.mxu0 0
        %1163 = vmatprep.subr.bf16.mxu0 0
        %1164 = vmatpush2.bf16.msra.mxu0 0
        %1165 = vmatprep.subr.bf16.mxu0 0
        %1166 = vmatpush2.bf16.msra.mxu0 0
        %1167 = vmatprep.subr.bf16.mxu0 0
        %1168 = vmatpush2.bf16.msra.mxu0 0
        %1169 = vmatprep.subr.bf16.mxu0 0
        %1170 = vmatpush2.bf16.msra.mxu0 0
        %1171 = vmatprep.subr.bf16.mxu0 0
        %1172 = vmatpush2.bf16.msra.mxu0 0
        %1173 = vmatprep.mubr.bf16.mxu0 0
        %1174 = vmatmul.mubr.bf16.gmra.mxu0 %v1139
        %v1175 = vpop.f32.mrf.mxu0
        %v1176 = vadd.f32 0.0, %v1175
        %v1177 = vpop.f32.mrf.mxu0
        %v1178 = vpop.f32.mrf.mxu0
        %v1179 = vpop.f32.mrf.mxu0
        %1180 = vdwg.mxu0
        %vm1181 = vcmask 516096
        %1182 = vst.msk [vmem:[%s331] sm:$0x1] %vm1181, %v1176
        %v1183 = vmul.f32 %v1112, %v1112
        %v1184 = vmul.f32 %v1113, %v1113
        %v1185 = vmul.f32 %v1114, %v1114
        %v1186 = vmul.f32 %v1115, %v1115
        %v1187 = vpack.c.bf16 %v1184, %v1183
        %v1188 = vpack.c.bf16 %v1186, %v1185
        %1189 = vmatprep.subr.bf16.mxu0 0
        %1190 = vmatpush1.bf16.msra.mxu0 0
        %1191 = vmatprep.subr.bf16.mxu0 0
        %1192 = vmatpush1.bf16.msra.mxu0 0
        %1193 = vmatprep.subr.bf16.mxu0 0
        %1194 = vmatpush1.bf16.msra.mxu0 0
        %1195 = vmatprep.subr.bf16.mxu0 0
        %1196 = vmatpush1.bf16.msra.mxu0 0
        %1197 = vmatprep.subr.bf16.mxu0 0
        %1198 = vmatpush1.bf16.msra.mxu0 0
        %1199 = vmatprep.subr.bf16.mxu0 0
        %1200 = vmatpush1.bf16.msra.mxu0 0
        %1201 = vmatprep.subr.bf16.mxu0 0
        %1202 = vmatpush1.bf16.msra.mxu0 %v1188
        %1203 = vmatprep.subr.bf16.mxu0 0
        %1204 = vmatpush1.bf16.msra.mxu0 %v1187
        %1205 = vmatprep.subr.bf16.mxu0 0
        %1206 = vmatpush2.bf16.msra.mxu0 0
        %1207 = vmatprep.subr.bf16.mxu0 0
        %1208 = vmatpush2.bf16.msra.mxu0 0
        %1209 = vmatprep.subr.bf16.mxu0 0
        %1210 = vmatpush2.bf16.msra.mxu0 0
        %1211 = vmatprep.subr.bf16.mxu0 0
        %1212 = vmatpush2.bf16.msra.mxu0 0
        %1213 = vmatprep.subr.bf16.mxu0 0
        %1214 = vmatpush2.bf16.msra.mxu0 0
        %1215 = vmatprep.subr.bf16.mxu0 0
        %1216 = vmatpush2.bf16.msra.mxu0 0
        %1217 = vmatprep.subr.bf16.mxu0 0
        %1218 = vmatpush2.bf16.msra.mxu0 0
        %1219 = vmatprep.subr.bf16.mxu0 0
        %1220 = vmatpush2.bf16.msra.mxu0 0
        %1221 = vmatprep.mubr.bf16.mxu0 0
        %1222 = vmatmul.mubr.bf16.gmra.mxu0 %v1139
        %v1223 = vpop.f32.mrf.mxu0
        %v1224 = vadd.f32 0.0, %v1223
        %v1225 = vpop.f32.mrf.mxu0
        %v1226 = vpop.f32.mrf.mxu0
        %v1227 = vpop.f32.mrf.mxu0
        %1228 = vdwg.mxu0
        %1229 = vst.msk [vmem:[%s337] sm:$0x1] %vm1181, %v1224
        %s1230 = sand.u32 %s169, 1
        %s1231 = scalar_lea.sflag [#allocation4], %s1230
        %s1232 = sand.u32 %s169, 1
        %s1233 = smul.addr %s1232, 16
        %s1234 = scalar_lea.vmem [#allocation3], %s1233
        %s1235 = sand.u32 %s25, 1
        %s1236 = scalar_lea.sflag [#allocation6], %s1235
        %s1237 = sand.u32 %s197, 1
        %s1238 = scalar_lea.vmem [#allocation5], %s1237
        %s1239 = sand.u32 %s25, 1
        %s1240 = scalar_lea.sflag [#allocation6], %s1239
        %s1241 = sand.u32 %s225, 1
        %s1242 = scalar_lea.vmem [#allocation7], %s1241
        // Predicated region
        $region41: #{tpu_custom_call.1} parent=39 // pred_check
          %p1243 = pneg %p179
        $region42: #{tpu_custom_call.1} parent=39 // pred_check_branch
          %1245 = sbr.rel (%p1243) target = $region44
        $region43: #{tpu_custom_call.1} parent=39 // pred_region
          %s1246 = smul.u32 4, %s30
          %s1248 = ssub.s32 256, 256
          %1249 = vsyncadd %s1231, %s1248
          %s1250 = smul.addr %s29, 8
          %s1251 = sadd.s32 %s1246, %s1250
          %s1252 = smul.addr %s1251, 64
          %s1253 = scalar_lea.hbm %s5, %s1252
          %s1254 = sshll.u32 %s1234, 4
          %s1255 = int_to_ptr.vmem [resolvable:$true] %s1254
          %1260 = dma.vmem_to_hbm [thread:$0]  %s1255, 256, %s1253, %s1231, 64, 64, 4
        $region44: #{tpu_custom_call.1} parent=39 // pred_fallthru
          _
        // Predicated region
        $region45: #{tpu_custom_call.1} parent=39 // pred_check
          %p1261 = pneg %p207
        $region46: #{tpu_custom_call.1} parent=39 // pred_check_branch
          %1263 = sbr.rel (%p1261) target = $region48
        $region47: #{tpu_custom_call.1} parent=39 // pred_region
          %s1265 = ssub.s32 16, 16
          %1266 = vsyncadd %s1236, %s1265
          %s1267 = smul.addr %s29, 2
          %s1268 = sadd.s32 %s30, %s1267
          %s1269 = smul.addr %s1268, 16
          %s1270 = scalar_lea.hbm %s6, %s1269
          %s1272 = sshll.u32 %s1238, 4
          %s1273 = int_to_ptr.vmem [resolvable:$true] %s1272
          %1275 = dma.vmem_to_hbm [thread:$0]  %s1273, 16, %s1270, %s1236
        $region48: #{tpu_custom_call.1} parent=39 // pred_fallthru
          _
        // Predicated region
        $region49: #{tpu_custom_call.1} parent=39 // pred_check
          %p1276 = pneg %p235
        $region50: #{tpu_custom_call.1} parent=39 // pred_check_branch
          %1278 = sbr.rel (%p1276) target = $region52
        $region51: #{tpu_custom_call.1} parent=39 // pred_region
          %s1280 = ssub.s32 16, 16
          %1281 = vsyncadd %s1240, %s1280
          %s1282 = smul.addr %s29, 2
          %s1283 = sadd.s32 %s30, %s1282
          %s1284 = smul.addr %s1283, 16
          %s1285 = scalar_lea.hbm %s7, %s1284
          %s1287 = sshll.u32 %s1242, 4
          %s1288 = int_to_ptr.vmem [resolvable:$true] %s1287
          %1290 = dma.vmem_to_hbm [thread:$0]  %s1288, 16, %s1285, %s1240
        $region52: #{tpu_custom_call.1} parent=39 // pred_fallthru
          _
      $region40: #{tpu_custom_call.1} parent=5 // pred_fallthru
        _
      %p1291 = scmp.le.s32.totalorder 2, %s20
      // Predicated region
      $region53: #{tpu_custom_call.1} parent=5 // pred_check
        %p1292 = pneg %p1291
      $region54: #{tpu_custom_call.1} parent=5 // pred_check_branch
        %1294 = sbr.rel (%p1292) target = $region56
      $region55: #{tpu_custom_call.1} parent=5 // pred_region
        %s1295 = ssub.s32 %s20, 2
        // Predicated region
        $region57: #{tpu_custom_call.1} parent=55 // pred_check
          %p1296 = pneg %p185
        $region58: #{tpu_custom_call.1} parent=55 // pred_check_branch
          %1298 = sbr.rel (%p1296) target = $region60
        $region59: #{tpu_custom_call.1} parent=55 // pred_region
          %s1299 = sand.u32 %s170, 1
          %s1300 = scalar_lea.sflag [#allocation4], %s1299
          %s1301 = sand.u32 %s170, 1
          %s1302 = smul.addr %s1301, 16
          %s1303 = scalar_lea.vmem [#allocation3], %s1302
          %1304 = dma.done %s1300, 256
        $region60: #{tpu_custom_call.1} parent=55 // pred_fallthru
          _
        // Predicated region
        $region61: #{tpu_custom_call.1} parent=55 // pred_check
          %p1305 = pneg %p213
        $region62: #{tpu_custom_call.1} parent=55 // pred_check_branch
          %1307 = sbr.rel (%p1305) target = $region64
        $region63: #{tpu_custom_call.1} parent=55 // pred_region
          %s1308 = sand.u32 %s26, 1
          %s1309 = scalar_lea.sflag [#allocation6], %s1308
          %s1310 = sand.u32 %s198, 1
          %s1311 = scalar_lea.vmem [#allocation5], %s1310
          %1312 = dma.done %s1309, 16
        $region64: #{tpu_custom_call.1} parent=55 // pred_fallthru
          _
        // Predicated region
        $region65: #{tpu_custom_call.1} parent=55 // pred_check
          %p1313 = pneg %p241
        $region66: #{tpu_custom_call.1} parent=55 // pred_check_branch
          %1315 = sbr.rel (%p1313) target = $region68
        $region67: #{tpu_custom_call.1} parent=55 // pred_region
          %s1316 = sand.u32 %s26, 1
          %s1317 = scalar_lea.sflag [#allocation6], %s1316
          %s1318 = sand.u32 %s226, 1
          %s1319 = scalar_lea.vmem [#allocation7], %s1318
          %1320 = dma.done %s1317, 16
        $region68: #{tpu_custom_call.1} parent=55 // pred_fallthru
          _
      $region56: #{tpu_custom_call.1} parent=5 // pred_fallthru
        _
    $region6: #{tpu_custom_call.1} parent=1 // loop_footer
      %s24 = sadd.s32 1, %s20
    $region7: #{tpu_custom_call.1} parent=1 // loop_footer_branch
      %19 = sbr.rel target = $region3
    $region8: #{tpu_custom_call.1} parent=1 // loop_exit
      _
    %1321 = vsyncpa [#allocation4], 1
    %s1322 = scalar_lea.sflag [#allocation4], 1
    %1323 = vsyncpa %s1322, 1
    %1324 = vsyncpa [#allocation6], 1
    %s1325 = scalar_lea.sflag [#allocation6], 1
    %1326 = vsyncpa %s1325, 1

</llo_original>
